<compile_context>
chip_gen: v7x
topology: tpu7x:2x2x1
jax: 0.10.0
libtpu: 0.0.40
codegen_flags: <defaults>
</compile_context>

<pallas_src>
import functools
import math

import jax
import jax.numpy as jnp
from jax import lax
from jax.experimental import pallas as pl
from jax.experimental.pallas import tpu as pltpu

NEG_INF = -1e30


def _round_up(x, m):
    return (x + m - 1) // m * m


# ----------------------------------------------------------------------------
# Kernel 1: fused QKV projection + RoPE for `head_group` heads per grid step.
# Writes K pre-transposed as (B, nh, hd, S) so kernel 2 never transposes it.
# ----------------------------------------------------------------------------
def _qkv_rope_kernel(x_ref, wqkv_ref, cos_ref, sin_ref, q_out, kt_out, v_out,
                     *, head_group):
    # x_ref:    (1, blk_s, H)            bf16 hidden-state block
    # wqkv_ref: (1, H, G*3*hd)           bf16 [q|k|v per head, G heads]
    # cos/sin:  (1, blk_s, hd)           f32 rotary tables at these positions
    # q_out/v_out: (1, G, blk_s, hd)     bf16
    # kt_out:      (1, G, hd, blk_s)     bf16 (pre-transposed K)
    hd = q_out.shape[-1]
    half = hd // 2
    scale = 1.0 / math.sqrt(hd)

    x = x_ref[0]                                                   # (blk_s, H)
    qkv = jnp.dot(x, wqkv_ref[0], preferred_element_type=jnp.float32)
    cos = cos_ref[0]
    sin = sin_ref[0]

    def rotate_half(t):
        return jnp.concatenate([-t[:, half:], t[:, :half]], axis=1)

    for g in range(head_group):
        base = g * 3 * hd
        q_raw = qkv[:, base:base + hd]
        k_raw = qkv[:, base + hd:base + 2 * hd]
        v = qkv[:, base + 2 * hd:base + 3 * hd]

        q = (q_raw * cos + rotate_half(q_raw) * sin) * scale   # fold 1/sqrt(hd)
        k = k_raw * cos + rotate_half(k_raw) * sin

        q_out[0, g] = q.astype(jnp.bfloat16)
        kt_out[0, g] = jnp.transpose(k).astype(jnp.bfloat16)   # (hd, blk_s)
        v_out[0, g] = v.astype(jnp.bfloat16)


# ----------------------------------------------------------------------------
# Kernel 2: flash attention (online softmax over kv blocks) + grouped o_proj.
# ----------------------------------------------------------------------------
def _flash_attn_kernel(q_ref, kt_ref, v_ref, wo_ref, o_ref,
                       m_scr, l_scr, acc_scr, ctx_scr, oacc_scr,
                       *, s_valid, blk_q, blk_kv, head_group):
    # grid = (B, q_blocks, heads, kv_blocks); output block depends on (b, qi)
    # only, so heads / kv blocks are consecutive revisit ("arbitrary") axes.
    qi = pl.program_id(1)
    h = pl.program_id(2)
    kv = pl.program_id(3)
    num_h = pl.num_programs(2)
    num_kv = pl.num_programs(3)
    hd = v_ref.shape[-1]

    @pl.when(kv == 0)
    def _():
        m_scr[...] = jnp.full_like(m_scr, NEG_INF)
        l_scr[...] = jnp.zeros_like(l_scr)
        acc_scr[...] = jnp.zeros_like(acc_scr)

    q_lo = qi * blk_q
    k_lo = kv * blk_kv
    # needed: not entirely above the causal diagonal nor entirely key-padding
    block_needed = jnp.logical_and(k_lo <= q_lo + (blk_q - 1), k_lo < s_valid)
    # fully unmasked: entirely below the diagonal and entirely valid keys
    block_full = jnp.logical_and(k_lo + (blk_kv - 1) <= q_lo,
                                 k_lo + blk_kv <= s_valid)

    def scores():
        # (blk_q, hd) @ (hd, blk_kv): K pre-transposed -> no per-step vxpose
        return jnp.dot(q_ref[0, 0], kt_ref[0, 0],
                       preferred_element_type=jnp.float32)

    def online_softmax_update(s):
        m_prev = m_scr[...]
        m_new = jnp.maximum(m_prev, jnp.max(s, axis=-1, keepdims=True))
        alpha = jnp.exp(m_prev - m_new)
        p = jnp.exp(s - m_new)
        l_scr[...] = alpha * l_scr[...] + jnp.sum(p, axis=-1, keepdims=True)
        acc_scr[...] = alpha * acc_scr[...] + jnp.dot(
            p.astype(jnp.bfloat16), v_ref[0, 0],
            preferred_element_type=jnp.float32)
        m_scr[...] = m_new

    @pl.when(jnp.logical_and(block_needed, block_full))
    def _():                                   # interior block: no mask math
        online_softmax_update(scores())

    @pl.when(jnp.logical_and(block_needed, jnp.logical_not(block_full)))
    def _():                                   # diagonal / padded block
        s = scores()
        row = q_lo + lax.broadcasted_iota(jnp.int32, s.shape, 0)
        col = k_lo + lax.broadcasted_iota(jnp.int32, s.shape, 1)
        ok = jnp.logical_and(col <= row, col < s_valid)
        online_softmax_update(jnp.where(ok, s, NEG_INF))

    @pl.when(kv == num_kv - 1)
    def _():
        attn = acc_scr[...] / l_scr[...]                    # (blk_q, hd) f32

        # stash this head's normalized output into its (static) group slot
        for g in range(head_group):
            @pl.when(h % head_group == g)
            def _(g=g):
                ctx_scr[:, g * hd:(g + 1) * hd] = attn

        @pl.when(h % head_group == head_group - 1)
        def _():
            # o_proj for the whole head group: K = G*hd fills a 256-deep MXU
            contrib = jnp.dot(ctx_scr[...].astype(jnp.bfloat16), wo_ref[0],
                              preferred_element_type=jnp.float32)  # (blk_q, H)

            @pl.when(h == head_group - 1)
            def _():
                oacc_scr[...] = contrib

            @pl.when(h > head_group - 1)
            def _():
                oacc_scr[...] = oacc_scr[...] + contrib

            @pl.when(h == num_h - 1)
            def _():
                # single lane-dense store of the (blk_q, H) output tile
                o_ref[0] = oacc_scr[...].astype(o_ref.dtype)


# ----------------------------------------------------------------------------
# Host-side wrappers
# ----------------------------------------------------------------------------
def _default_vmem_limit_bytes():
    # ~102 MiB on v5e/v6e (128 MiB physical), ~48 MiB on v7x (64 MiB physical)
    try:
        info = pltpu.get_tpu_info()
        cap = None
        for name in ("vmem_capacity_bytes", "vmem_size_bytes", "vmem_bytes"):
            cap = getattr(info, name, None)
            if cap:
                break
        if cap:
            return int(min(cap - (16 << 20), int(cap * 0.8)))
    except Exception:
        pass
    return 48 << 20      # safe on every generation


def _choose_tiles(S, blk_q, blk_kv, blk_s, single_block_max):
    s8 = _round_up(max(S, 8), 8)
    if s8 <= single_block_max:
        # short sequences: one block along seq -> no per-grid-step overhead
        return s8, s8, s8, s8
    blk_q = max(128, _round_up(blk_q, 128))
    blk_kv = max(128, _round_up(blk_kv, 128))    # lane dim of K^T tiles
    blk_s = max(128, _round_up(blk_s, 128))      # lane dim of K^T output tiles
    S_pad = _round_up(S, math.lcm(blk_q, blk_kv, blk_s))
    return S_pad, blk_q, blk_kv, blk_s


def prepare_weights(wq, wk, wv, wo, num_heads, head_group=2):
    """Re-layout nn.Linear weights (out,in) into the kernel layout ONCE.
    head_group=2 is best for v6e/v7x (256x256 MXU); use 1 on v5e."""
    H = wq.shape[1]
    hd = H // num_heads
    if head_group < 1 or num_heads % head_group != 0:
        head_group = 1
    G = head_group

    def per_head(w):                       # (H_out, H_in) -> (nh, H_in, hd)
        return jnp.transpose(w).reshape(H, num_heads, hd).transpose(1, 0, 2)

    qkv = jnp.concatenate([per_head(wq), per_head(wk), per_head(wv)],
                          axis=-1)                               # (nh, H, 3hd)
    wqkv_g = (qkv.reshape(num_heads // G, G, H, 3 * hd)
                 .transpose(0, 2, 1, 3)
                 .reshape(num_heads // G, H, G * 3 * hd)).astype(jnp.bfloat16)
    wo_g = jnp.transpose(wo).reshape(num_heads // G, G * hd, H).astype(
        jnp.bfloat16)
    return wqkv_g, wo_g


def llama_attention_pallas(x, wqkv_heads, wo_heads, cos_sel, sin_sel, *,
                           num_heads, blk_q=512, blk_kv=1024, blk_s=512,
                           single_block_max=512, out_dtype=jnp.bfloat16,
                           vmem_limit_bytes=None):
    """x: (B,S,H). wqkv_heads: (nh/G,H,G*3*hd) bf16. wo_heads: (nh/G,G*hd,H).
    cos/sin_sel: (B,S,hd) rotary tables gathered at position_ids.
    Returns causal attention output (B,S,H) in out_dtype.
    v6e/v5e (128 MiB VMEM): blk_q/blk_kv can be raised to 1024 for long S.
    v7x note: at B=1 keep B*(S/blk_q) >= 2 so both TensorCores get work."""
    B, S, H = x.shape
    nh = num_heads
    assert H % nh == 0
    hd = H // nh
    G = wqkv_heads.shape[-1] // (3 * hd)
    assert nh % G == 0
    assert wqkv_heads.shape == (nh // G, H, G * 3 * hd)
    assert wo_heads.shape == (nh // G, G * hd, H)
    assert cos_sel.shape == (B, S, hd) and sin_sel.shape == (B, S, hd)

    S_pad, blk_q, blk_kv, blk_s = _choose_tiles(S, blk_q, blk_kv, blk_s,
                                                single_block_max)
    if vmem_limit_bytes is None:
        vmem_limit_bytes = _default_vmem_limit_bytes()

    if S_pad != S:
        pad = ((0, 0), (0, S_pad - S), (0, 0))
        x = jnp.pad(x, pad)
        cos_sel = jnp.pad(cos_sel, pad)
        sin_sel = jnp.pad(sin_sel, pad)

    xb = x.astype(jnp.bfloat16)            # bf16 MXU inputs, halves x DMA
    cosf = cos_sel.astype(jnp.float32)     # RoPE math kept in f32
    sinf = sin_sel.astype(jnp.float32)

    num_hg = nh // G

    # ---- kernel 1: QKV projection + RoPE -> q, k^T, v in bf16 ----
    qkv_cost = pl.CostEstimate(
        flops=int(6 * B * S_pad * H * H),
        transcendentals=0,
        bytes_accessed=int(2 * B * num_hg * S_pad * H + 6 * nh * H * hd
                           + 6 * B * nh * S_pad * hd + 8 * B * S_pad * hd))
    q, kt, v = pl.pallas_call(
        functools.partial(_qkv_rope_kernel, head_group=G),
        out_shape=(jax.ShapeDtypeStruct((B, nh, S_pad, hd), jnp.bfloat16),
                   jax.ShapeDtypeStruct((B, nh, hd, S_pad), jnp.bfloat16),
                   jax.ShapeDtypeStruct((B, nh, S_pad, hd), jnp.bfloat16)),
        grid_spec=pltpu.PrefetchScalarGridSpec(
            num_scalar_prefetch=0,
            grid=(B, num_hg, S_pad // blk_s),
            in_specs=[
                pl.BlockSpec((1, blk_s, H), lambda b, hg, si: (b, si, 0)),
                pl.BlockSpec((1, H, G * 3 * hd), lambda b, hg, si: (hg, 0, 0)),
                pl.BlockSpec((1, blk_s, hd), lambda b, hg, si: (b, si, 0)),
                pl.BlockSpec((1, blk_s, hd), lambda b, hg, si: (b, si, 0)),
            ],
            out_specs=[
                pl.BlockSpec((1, G, blk_s, hd), lambda b, hg, si: (b, hg, si, 0)),
                pl.BlockSpec((1, G, hd, blk_s), lambda b, hg, si: (b, hg, 0, si)),
                pl.BlockSpec((1, G, blk_s, hd), lambda b, hg, si: (b, hg, si, 0)),
            ],
        ),
        compiler_params=pltpu.CompilerParams(
            dimension_semantics=("parallel", "parallel", "parallel"),
            vmem_limit_bytes=vmem_limit_bytes),
        cost_estimate=qkv_cost,
    )(xb, wqkv_heads, cosf, sinf)

    # ---- kernel 2: flash attention + grouped o_proj -> (B, S_pad, H) ----
    def kv_clamp(qi, kv):
        # causally dead kv blocks re-map to the last needed block -> no DMA
        last_needed = (qi * blk_q + (blk_q - 1)) // blk_kv
        return jnp.minimum(kv, last_needed)

    flash_cost = pl.CostEstimate(
        flops=int(2 * B * nh * S_pad * S_pad * hd + 2 * B * S_pad * H * H),
        transcendentals=int(B * nh * S_pad * S_pad // 2),
        bytes_accessed=int(6 * B * nh * S_pad * hd
                           + 2 * B * (S_pad // blk_q) * nh * hd * H
                           + 2 * B * S_pad * H))
    out = pl.pallas_call(
        functools.partial(_flash_attn_kernel, s_valid=S, blk_q=blk_q,
                          blk_kv=blk_kv, head_group=G),
        out_shape=jax.ShapeDtypeStruct((B, S_pad, H), out_dtype),
        grid_spec=pltpu.PrefetchScalarGridSpec(
            num_scalar_prefetch=0,
            grid=(B, S_pad // blk_q, nh, S_pad // blk_kv),
            in_specs=[
                pl.BlockSpec((1, 1, blk_q, hd),
                             lambda b, qi, h, kv: (b, h, qi, 0)),
                pl.BlockSpec((1, 1, hd, blk_kv),
                             lambda b, qi, h, kv: (b, h, 0, kv_clamp(qi, kv))),
                pl.BlockSpec((1, 1, blk_kv, hd),
                             lambda b, qi, h, kv: (b, h, kv_clamp(qi, kv), 0)),
                pl.BlockSpec((1, G * hd, H),
                             lambda b, qi, h, kv: (h // G, 0, 0)),
            ],
            out_specs=pl.BlockSpec((1, blk_q, H),
                                   lambda b, qi, h, kv: (b, qi, 0)),
            scratch_shapes=[
                pltpu.VMEM((blk_q, 1), jnp.float32),       # running max m
                pltpu.VMEM((blk_q, 1), jnp.float32),       # running sum l
                pltpu.VMEM((blk_q, hd), jnp.float32),      # per-head p@v acc
                pltpu.VMEM((blk_q, G * hd), jnp.float32),  # head-group context
                pltpu.VMEM((blk_q, H), jnp.float32),       # o_proj accumulator
            ],
        ),
        compiler_params=pltpu.CompilerParams(
            dimension_semantics=("parallel", "parallel", "arbitrary",
                                 "arbitrary"),
            vmem_limit_bytes=vmem_limit_bytes),
        cost_estimate=flash_cost,
    )(q, kt, v, wo_heads)

    return out[:, :S, :] if S_pad != S else out


# ----------------------------------------------------------------------------
# RoPE tables + pure-JAX reference
# ----------------------------------------------------------------------------
def build_rope_tables(head_dim, seq_len, base=10000.0):
    # matches LlamaRotaryEmbedding._set_cos_sin_cache + cat((c, c), -1)
    inv_freq = 1.0 / (base ** (jnp.arange(0, head_dim, 2, dtype=jnp.float32)
                               / head_dim))
    t = jnp.arange(seq_len, dtype=jnp.float32)
    freqs = jnp.einsum("s,d->sd", t, inv_freq)
    emb = jnp.concatenate([freqs, freqs], axis=-1)
    return jnp.cos(emb), jnp.sin(emb)


def ref_attention(x, wq, wk, wv, wo, cos_sel, sin_sel, num_heads):
    """Pure-JAX f32 reference (causal)."""
    B, S, H = x.shape
    hd = H // num_heads
    q = (x @ wq.T).reshape(B, S, num_heads, hd).transpose(0, 2, 1, 3)
    k = (x @ wk.T).reshape(B, S, num_heads, hd).transpose(0, 2, 1, 3)
    v = (x @ wv.T).reshape(B, S, num_heads, hd).transpose(0, 2, 1, 3)

    cos = cos_sel[:, None]
    sin = sin_sel[:, None]

    def rot_half(t):
        return jnp.concatenate([-t[..., hd // 2:], t[..., :hd // 2]], axis=-1)

    q = q * cos + rot_half(q) * sin
    k = k * cos + rot_half(k) * sin

    s = jnp.einsum("bhqd,bhkd->bhqk", q, k) / math.sqrt(hd)
    causal = jnp.tril(jnp.ones((S, S), dtype=bool))
    s = jnp.where(causal[None, None], s, -1e30)
    p = jax.nn.softmax(s, axis=-1)
    o = jnp.einsum("bhqk,bhkd->bhqd", p, v)
    o = o.transpose(0, 2, 1, 3).reshape(B, S, H)
    return o @ wo.T


if __name__ == "__main__":
    # Small TPU-friendly shapes: head_dim = 128 (real Llama head size = one
    # lane width), 2 heads (exercises the head_group=2 paths), S=250 so the
    # sequence gets padded to 256 (exercises key-padding masking).
    B, S, H = 2, 250, 256
    num_heads = 2
    hd = H // num_heads

    key = jax.random.PRNGKey(0)
    k0, k1, k2, k3, k4 = jax.random.split(key, 5)
    x = jax.random.normal(k0, (B, S, H), dtype=jnp.float32)
    wscale = 1.0 / math.sqrt(H)
    wq = jax.random.normal(k1, (H, H), dtype=jnp.float32) * wscale  # (out,in)
    wk = jax.random.normal(k2, (H, H), dtype=jnp.float32) * wscale
    wv = jax.random.normal(k3, (H, H), dtype=jnp.float32) * wscale
    wo = jax.random.normal(k4, (H, H), dtype=jnp.float32) * wscale

    cos_tab, sin_tab = build_rope_tables(hd, S)
    position_ids = jnp.broadcast_to(jnp.arange(S), (B, S))
    cos_sel = cos_tab[position_ids]
    sin_sel = sin_tab[position_ids]

    # weight re-layout done once (cache this in a real model)
    wqkv_heads, wo_heads = prepare_weights(wq, wk, wv, wo, num_heads,
                                           head_group=2)
    ref = ref_attention(x, wq, wk, wv, wo, cos_sel, sin_sel, num_heads)

    # (a) multi-block path: 128-wide tiles -> 2 query x 2 kv blocks; exercises
    #     online softmax, dead-block DMA clamping, masked/unmasked fast paths,
    #     grouped o_proj accumulation and sequence padding (250 -> 256).
    out_a = llama_attention_pallas(
        x, wqkv_heads, wo_heads, cos_sel, sin_sel, num_heads=num_heads,
        blk_q=128, blk_kv=128, blk_s=128, single_block_max=0)
    out_a = jax.block_until_ready(out_a)

    # (b) default short-sequence path: single block along the sequence.
    out_b = llama_attention_pallas(
        x, wqkv_heads, wo_heads, cos_sel, sin_sel, num_heads=num_heads)
    out_b = jax.block_until_ready(out_b)

    for name, out in (("tiled", out_a), ("single_block", out_b)):
        assert out.shape == (B, S, H), (name, out.shape)
        err = jnp.abs(out.astype(jnp.float32) - ref)
        max_err = float(jnp.max(err))
        mean_err = float(jnp.mean(err))
        # bf16 MXU inputs / bf16 output vs an f32 reference -> loose bound
        assert max_err < 2.5e-1 and mean_err < 5e-2, (name, max_err, mean_err)
    print("KERNEL_OK")
</pallas_src>

<mosaic_0001>
module attributes {stable_mosaic.version = 11 : i64} {
  func.func @_qkv_rope_kernel(%arg0: i32, %arg1: i32, %arg2: i32, %arg3: memref<1x128x256xbf16, #tpu.memory_space<vmem>>, %arg4: memref<1x256x768xbf16, #tpu.memory_space<vmem>>, %arg5: memref<1x128x128xf32, #tpu.memory_space<vmem>>, %arg6: memref<1x128x128xf32, #tpu.memory_space<vmem>>, %arg7: memref<1x2x128x128xbf16, #tpu.memory_space<vmem>>, %arg8: memref<1x2x128x128xbf16, #tpu.memory_space<vmem>>, %arg9: memref<1x2x128x128xbf16, #tpu.memory_space<vmem>>) attributes {dimension_semantics = [#tpu.dimension_semantics<parallel>, #tpu.dimension_semantics<parallel>, #tpu.dimension_semantics<parallel>], iteration_bounds = array<i64: 2, 1, 2>, scalar_prefetch = 0 : i64, scratch_operands = 0 : i64, tpu.core_type = #tpu.core_type<tc>, window_params = [{transform_indices = @transform_0, window_bounds = array<i64: 1, 128, 256>}, {transform_indices = @transform_1, window_bounds = array<i64: 1, 256, 768>}, {transform_indices = @transform_2, window_bounds = array<i64: 1, 128, 128>}, {transform_indices = @transform_3, window_bounds = array<i64: 1, 128, 128>}, {transform_indices = @transform_4, window_bounds = array<i64: 1, 2, 128, 128>}, {transform_indices = @transform_5, window_bounds = array<i64: 1, 2, 128, 128>}, {transform_indices = @transform_6, window_bounds = array<i64: 1, 2, 128, 128>}]} {
    %c0 = arith.constant 0 : index
    %c0_0 = arith.constant 0 : index
    %c0_1 = arith.constant 0 : index
    %0 = vector.load %arg3[%c0, %c0_0, %c0_1] : memref<1x128x256xbf16, #tpu.memory_space<vmem>>, vector<1x128x256xbf16>
    %1 = vector.shape_cast %0 : vector<1x128x256xbf16> to vector<128x256xbf16>
    %c0_2 = arith.constant 0 : index
    %c0_3 = arith.constant 0 : index
    %c0_4 = arith.constant 0 : index
    %2 = vector.load %arg4[%c0_2, %c0_3, %c0_4] : memref<1x256x768xbf16, #tpu.memory_space<vmem>>, vector<1x256x768xbf16>
    %3 = vector.shape_cast %2 : vector<1x256x768xbf16> to vector<256x768xbf16>
    %cst = arith.constant dense<0.000000e+00> : vector<128x768xf32>
    %4 = tpu.matmul %1, %3, %cst {dimension_numbers = #tpu.dot_dimension_numbers<[1], [0], [0], [1], [0, 0, 1, 1], [], []>} : vector<128x256xbf16>, vector<256x768xbf16>, vector<128x768xf32> -> vector<128x768xf32>
    %c0_5 = arith.constant 0 : index
    %c0_6 = arith.constant 0 : index
    %c0_7 = arith.constant 0 : index
    %5 = vector.load %arg5[%c0_5, %c0_6, %c0_7] : memref<1x128x128xf32, #tpu.memory_space<vmem>>, vector<1x128x128xf32>
    %6 = vector.shape_cast %5 : vector<1x128x128xf32> to vector<128x128xf32>
    %c0_8 = arith.constant 0 : index
    %c0_9 = arith.constant 0 : index
    %c0_10 = arith.constant 0 : index
    %7 = vector.load %arg6[%c0_8, %c0_9, %c0_10] : memref<1x128x128xf32, #tpu.memory_space<vmem>>, vector<1x128x128xf32>
    %8 = vector.shape_cast %7 : vector<1x128x128xf32> to vector<128x128xf32>
    %9 = vector.extract_strided_slice %4 {offsets = [0, 0], sizes = [128, 128], strides = [1, 1]} : vector<128x768xf32> to vector<128x128xf32>
    %10 = vector.extract_strided_slice %4 {offsets = [0, 128], sizes = [128, 128], strides = [1, 1]} : vector<128x768xf32> to vector<128x128xf32>
    %11 = vector.extract_strided_slice %4 {offsets = [0, 256], sizes = [128, 128], strides = [1, 1]} : vector<128x768xf32> to vector<128x128xf32>
    %12 = arith.mulf %9, %6 : vector<128x128xf32>
    %13 = vector.extract_strided_slice %9 {offsets = [0, 64], sizes = [128, 64], strides = [1, 1]} : vector<128x128xf32> to vector<128x64xf32>
    %cst_11 = arith.constant 0.000000e+00 : f32
    %14 = vector.broadcast %cst_11 : f32 to vector<128x64xf32>
    %15 = arith.subf %14, %13 : vector<128x64xf32>
    %16 = vector.extract_strided_slice %9 {offsets = [0, 0], sizes = [128, 64], strides = [1, 1]} : vector<128x128xf32> to vector<128x64xf32>
    %17 = tpu.concatenate %15, %16 in 1 : vector<128x64xf32>, vector<128x64xf32> -> vector<128x128xf32>
    %18 = arith.mulf %17, %8 : vector<128x128xf32>
    %19 = arith.addf %12, %18 : vector<128x128xf32>
    %cst_12 = arith.constant 0.0883883461 : f32
    %20 = vector.broadcast %cst_12 : f32 to vector<128x128xf32>
    %21 = arith.mulf %19, %20 : vector<128x128xf32>
    %22 = arith.mulf %10, %6 : vector<128x128xf32>
    %23 = vector.extract_strided_slice %10 {offsets = [0, 64], sizes = [128, 64], strides = [1, 1]} : vector<128x128xf32> to vector<128x64xf32>
    %cst_13 = arith.constant 0.000000e+00 : f32
    %24 = vector.broadcast %cst_13 : f32 to vector<128x64xf32>
    %25 = arith.subf %24, %23 : vector<128x64xf32>
    %26 = vector.extract_strided_slice %10 {offsets = [0, 0], sizes = [128, 64], strides = [1, 1]} : vector<128x128xf32> to vector<128x64xf32>
    %27 = tpu.concatenate %25, %26 in 1 : vector<128x64xf32>, vector<128x64xf32> -> vector<128x128xf32>
    %28 = arith.mulf %27, %8 : vector<128x128xf32>
    %29 = arith.addf %22, %28 : vector<128x128xf32>
    %30 = arith.truncf %21 : vector<128x128xf32> to vector<128x128xbf16>
    %c0_14 = arith.constant 0 : index
    %c0_15 = arith.constant 0 : index
    %c0_16 = arith.constant 0 : index
    %c0_17 = arith.constant 0 : index
    %31 = vector.load %arg7[%c0_14, %c0_15, %c0_16, %c0_17] : memref<1x2x128x128xbf16, #tpu.memory_space<vmem>>, vector<1x1x128x128xbf16>
    %32 = vector.shape_cast %31 : vector<1x1x128x128xbf16> to vector<128x128xbf16>
    %33 = vector.shape_cast %30 : vector<128x128xbf16> to vector<1x1x128x128xbf16>
    tpu.vector_store %arg7[%c0_14, %c0_15, %c0_16, %c0_17], %33 {strides = array<i32>} : memref<1x2x128x128xbf16, #tpu.memory_space<vmem>>, vector<1x1x128x128xbf16>,
    %34 = tpu.transpose %29, [1, 0] : vector<128x128xf32> -> vector<128x128xf32>
    %35 = arith.truncf %34 : vector<128x128xf32> to vector<128x128xbf16>
    %c0_18 = arith.constant 0 : index
    %c0_19 = arith.constant 0 : index
    %c0_20 = arith.constant 0 : index
    %c0_21 = arith.constant 0 : index
    %36 = vector.load %arg8[%c0_18, %c0_19, %c0_20, %c0_21] : memref<1x2x128x128xbf16, #tpu.memory_space<vmem>>, vector<1x1x128x128xbf16>
    %37 = vector.shape_cast %36 : vector<1x1x128x128xbf16> to vector<128x128xbf16>
    %38 = vector.shape_cast %35 : vector<128x128xbf16> to vector<1x1x128x128xbf16>
    tpu.vector_store %arg8[%c0_18, %c0_19, %c0_20, %c0_21], %38 {strides = array<i32>} : memref<1x2x128x128xbf16, #tpu.memory_space<vmem>>, vector<1x1x128x128xbf16>,
    %39 = arith.truncf %11 : vector<128x128xf32> to vector<128x128xbf16>
    %c0_22 = arith.constant 0 : index
    %c0_23 = arith.constant 0 : index
    %c0_24 = arith.constant 0 : index
    %c0_25 = arith.constant 0 : index
    %40 = vector.load %arg9[%c0_22, %c0_23, %c0_24, %c0_25] : memref<1x2x128x128xbf16, #tpu.memory_space<vmem>>, vector<1x1x128x128xbf16>
    %41 = vector.shape_cast %40 : vector<1x1x128x128xbf16> to vector<128x128xbf16>
    %42 = vector.shape_cast %39 : vector<128x128xbf16> to vector<1x1x128x128xbf16>
    tpu.vector_store %arg9[%c0_22, %c0_23, %c0_24, %c0_25], %42 {strides = array<i32>} : memref<1x2x128x128xbf16, #tpu.memory_space<vmem>>, vector<1x1x128x128xbf16>,
    %43 = vector.extract_strided_slice %4 {offsets = [0, 384], sizes = [128, 128], strides = [1, 1]} : vector<128x768xf32> to vector<128x128xf32>
    %44 = vector.extract_strided_slice %4 {offsets = [0, 512], sizes = [128, 128], strides = [1, 1]} : vector<128x768xf32> to vector<128x128xf32>
    %45 = vector.extract_strided_slice %4 {offsets = [0, 640], sizes = [128, 128], strides = [1, 1]} : vector<128x768xf32> to vector<128x128xf32>
    %46 = arith.mulf %43, %6 : vector<128x128xf32>
    %47 = vector.extract_strided_slice %43 {offsets = [0, 64], sizes = [128, 64], strides = [1, 1]} : vector<128x128xf32> to vector<128x64xf32>
    %cst_26 = arith.constant 0.000000e+00 : f32
    %48 = vector.broadcast %cst_26 : f32 to vector<128x64xf32>
    %49 = arith.subf %48, %47 : vector<128x64xf32>
    %50 = vector.extract_strided_slice %43 {offsets = [0, 0], sizes = [128, 64], strides = [1, 1]} : vector<128x128xf32> to vector<128x64xf32>
    %51 = tpu.concatenate %49, %50 in 1 : vector<128x64xf32>, vector<128x64xf32> -> vector<128x128xf32>
    %52 = arith.mulf %51, %8 : vector<128x128xf32>
    %53 = arith.addf %46, %52 : vector<128x128xf32>
    %cst_27 = arith.constant 0.0883883461 : f32
    %54 = vector.broadcast %cst_27 : f32 to vector<128x128xf32>
    %55 = arith.mulf %53, %54 : vector<128x128xf32>
    %56 = arith.mulf %44, %6 : vector<128x128xf32>
    %57 = vector.extract_strided_slice %44 {offsets = [0, 64], sizes = [128, 64], strides = [1, 1]} : vector<128x128xf32> to vector<128x64xf32>
    %cst_28 = arith.constant 0.000000e+00 : f32
    %58 = vector.broadcast %cst_28 : f32 to vector<128x64xf32>
    %59 = arith.subf %58, %57 : vector<128x64xf32>
    %60 = vector.extract_strided_slice %44 {offsets = [0, 0], sizes = [128, 64], strides = [1, 1]} : vector<128x128xf32> to vector<128x64xf32>
    %61 = tpu.concatenate %59, %60 in 1 : vector<128x64xf32>, vector<128x64xf32> -> vector<128x128xf32>
    %62 = arith.mulf %61, %8 : vector<128x128xf32>
    %63 = arith.addf %56, %62 : vector<128x128xf32>
    %64 = arith.truncf %55 : vector<128x128xf32> to vector<128x128xbf16>
    %c0_29 = arith.constant 0 : index
    %c1 = arith.constant 1 : index
    %c0_30 = arith.constant 0 : index
    %c0_31 = arith.constant 0 : index
    %65 = vector.load %arg7[%c0_29, %c1, %c0_30, %c0_31] : memref<1x2x128x128xbf16, #tpu.memory_space<vmem>>, vector<1x1x128x128xbf16>
    %66 = vector.shape_cast %65 : vector<1x1x128x128xbf16> to vector<128x128xbf16>
    %67 = vector.shape_cast %64 : vector<128x128xbf16> to vector<1x1x128x128xbf16>
    tpu.vector_store %arg7[%c0_29, %c1, %c0_30, %c0_31], %67 {strides = array<i32>} : memref<1x2x128x128xbf16, #tpu.memory_space<vmem>>, vector<1x1x128x128xbf16>,
    %68 = tpu.transpose %63, [1, 0] : vector<128x128xf32> -> vector<128x128xf32>
    %69 = arith.truncf %68 : vector<128x128xf32> to vector<128x128xbf16>
    %c0_32 = arith.constant 0 : index
    %c1_33 = arith.constant 1 : index
    %c0_34 = arith.constant 0 : index
    %c0_35 = arith.constant 0 : index
    %70 = vector.load %arg8[%c0_32, %c1_33, %c0_34, %c0_35] : memref<1x2x128x128xbf16, #tpu.memory_space<vmem>>, vector<1x1x128x128xbf16>
    %71 = vector.shape_cast %70 : vector<1x1x128x128xbf16> to vector<128x128xbf16>
    %72 = vector.shape_cast %69 : vector<128x128xbf16> to vector<1x1x128x128xbf16>
    tpu.vector_store %arg8[%c0_32, %c1_33, %c0_34, %c0_35], %72 {strides = array<i32>} : memref<1x2x128x128xbf16, #tpu.memory_space<vmem>>, vector<1x1x128x128xbf16>,
    %73 = arith.truncf %45 : vector<128x128xf32> to vector<128x128xbf16>
    %c0_36 = arith.constant 0 : index
    %c1_37 = arith.constant 1 : index
    %c0_38 = arith.constant 0 : index
    %c0_39 = arith.constant 0 : index
    %74 = vector.load %arg9[%c0_36, %c1_37, %c0_38, %c0_39] : memref<1x2x128x128xbf16, #tpu.memory_space<vmem>>, vector<1x1x128x128xbf16>
    %75 = vector.shape_cast %74 : vector<1x1x128x128xbf16> to vector<128x128xbf16>
    %76 = vector.shape_cast %73 : vector<128x128xbf16> to vector<1x1x128x128xbf16>
    tpu.vector_store %arg9[%c0_36, %c1_37, %c0_38, %c0_39], %76 {strides = array<i32>} : memref<1x2x128x128xbf16, #tpu.memory_space<vmem>>, vector<1x1x128x128xbf16>,
    return
  }
  func.func @transform_0(%arg0: i32, %arg1: i32, %arg2: i32) -> (i32, i32, i32) {
    %c0_i32 = arith.constant 0 : i32
    %c0_i32_0 = arith.constant 0 : i32
    return %arg0, %arg2, %c0_i32 : i32, i32, i32
  }
  func.func @transform_1(%arg0: i32, %arg1: i32, %arg2: i32) -> (i32, i32, i32) {
    %c0_i32 = arith.constant 0 : i32
    %c0_i32_0 = arith.constant 0 : i32
    %c0_i32_1 = arith.constant 0 : i32
    return %arg1, %c0_i32, %c0_i32_0 : i32, i32, i32
  }
  func.func @transform_2(%arg0: i32, %arg1: i32, %arg2: i32) -> (i32, i32, i32) {
    %c0_i32 = arith.constant 0 : i32
    %c0_i32_0 = arith.constant 0 : i32
    return %arg0, %arg2, %c0_i32 : i32, i32, i32
  }
  func.func @transform_3(%arg0: i32, %arg1: i32, %arg2: i32) -> (i32, i32, i32) {
    %c0_i32 = arith.constant 0 : i32
    %c0_i32_0 = arith.constant 0 : i32
    return %arg0, %arg2, %c0_i32 : i32, i32, i32
  }
  func.func @transform_4(%arg0: i32, %arg1: i32, %arg2: i32) -> (i32, i32, i32, i32) {
    %c0_i32 = arith.constant 0 : i32
    %c0_i32_0 = arith.constant 0 : i32
    return %arg0, %arg1, %arg2, %c0_i32 : i32, i32, i32, i32
  }
  func.func @transform_5(%arg0: i32, %arg1: i32, %arg2: i32) -> (i32, i32, i32, i32) {
    %c0_i32 = arith.constant 0 : i32
    %c0_i32_0 = arith.constant 0 : i32
    return %arg0, %arg1, %c0_i32, %arg2 : i32, i32, i32, i32
  }
  func.func @transform_6(%arg0: i32, %arg1: i32, %arg2: i32) -> (i32, i32, i32, i32) {
    %c0_i32 = arith.constant 0 : i32
    %c0_i32_0 = arith.constant 0 : i32
    return %arg0, %arg1, %arg2, %c0_i32 : i32, i32, i32, i32
  }
}

</mosaic_0001>

<llo_original>
// kernel: tpu_custom_call.1
$region0: #{tpu_custom_call.1}
  #allocation0 [shape = 'u32[]', space=smem, size = 0x4, offset = 0x4, fixed_abs, tag = 'smem constant byte address 0x4 - core index']
  #allocation1 [shape = 'u32[144,128]{1,0:T(1,128)}', space=vmem, size = 0x12000, scoped, tag = 'internal scratch']
  #allocation13 [shape = 's32[]', space=sflag, size = 0x4, offset = 0, fixed_abs, tag = 'sflag constant byte address 0x0 - dummy sync flag']
  #allocation15 [shape = 's32[]', space=sflag, size = 0x4, offset = 0, fixed_abs, tag = 'sflag constant byte address 0x0 - dummy sync flag']
  %s0 = inlined_call_operand.hbm [shape: bf16[2,256,256], index: 0, kind: input, shape index: {}]
  %s1 = inlined_call_operand.hbm [shape: bf16[1,256,768], index: 1, kind: input, shape index: {}]
  %s2 = inlined_call_operand.hbm [shape: f32[2,256,128], index: 2, kind: input, shape index: {}]
  %s3 = inlined_call_operand.hbm [shape: f32[2,256,128], index: 3, kind: input, shape index: {}]
  %s4 = inlined_call_operand.hbm [shape: bf16[2,2,256,128], index: 4, kind: output, shape index: {0}]
  %s5 = inlined_call_operand.hbm [shape: bf16[2,2,128,256], index: 5, kind: output, shape index: {1}]
  %s6 = inlined_call_operand.hbm [shape: bf16[2,2,256,128], index: 6, kind: output, shape index: {2}]
  %7 = xla_tuple %s4, %s5, %s6
  %s8 = sld [smem:[#allocation0]]
  $region81: #{tpu_custom_call.1} parent=0
    _
  %s10 = ssub.s32 1, %s8
  %s11 = scalar_select 0, %s10, %s8
  $region1: #{tpu_custom_call.1} parent=0
    #allocation2 [shape = 'u8[131072]{0}', space=vmem, size = 0x20000, scoped, tag = 'input window, operand 0']
    #allocation3 [shape = 's32[2]{0}', space=sflag, size = 0x8, scoped, tag = 'scoped memory for tpu_custom_call.1']
    #allocation4 [shape = 's32[2]{0}', space=sflag, size = 0x8, scoped, tag = 'scoped memory for tpu_custom_call.1']
    #allocation5 [shape = 'u8[393216]{0}', space=vmem, size = 0x60000, scoped, tag = 'input window, operand 1, single buffered']
    #allocation6 [shape = 's32[1]{0}', space=sflag, size = 0x4, scoped, tag = 'scoped memory for tpu_custom_call.1']
    #allocation7 [shape = 'u8[131072]{0}', space=vmem, size = 0x20000, scoped, tag = 'input window, operand 2']
    #allocation8 [shape = 'u8[131072]{0}', space=vmem, size = 0x20000, scoped, tag = 'input window, operand 3']
    #allocation9 [shape = 'u8[131072]{0}', space=vmem, size = 0x20000, scoped, tag = 'output window, operand 0']
    #allocation10 [shape = 'u8[131072]{0}', space=vmem, size = 0x20000, scoped, tag = 'output window, operand 1']
    #allocation11 [shape = 's32[2]{0}', space=sflag, size = 0x8, scoped, tag = 'scoped memory for tpu_custom_call.1']
    #allocation12 [shape = 'u8[131072]{0}', space=vmem, size = 0x20000, scoped, tag = 'output window, operand 2']
    %12 = vsyncpa [#allocation3], 0
    %s13 = scalar_lea.sflag [#allocation3], 1
    %14 = vsyncpa %s13, 0
    %15 = vsyncpa [#allocation6], 0
    %16 = vsyncpa [#allocation4], 0
    %s17 = scalar_lea.sflag [#allocation4], 1
    %18 = vsyncpa %s17, 0
    %19 = vsyncpa [#allocation11], 0
    %s20 = scalar_lea.sflag [#allocation11], 1
    %21 = vsyncpa %s20, 0
    loop: start=0, step=1, limit=6
    $region2: #{tpu_custom_call.1} parent=1 // loop_pre_header
      _
    $region3: #{tpu_custom_call.1} parent=1 // loop_header
      %s23 = sphi 0, %s27
      %p24 = scmp.ge.s32.totalorder %s23, 6
      %s30 = sphi 0, %s49
      %s31 = sphi 0, %s45
      %s32 = sphi 0, %s41
      %s33 = sphi 0, %s30
      %s34 = sphi 0, %s31
      %s35 = sphi 0, %s32
      %s36 = sphi 0, %s33
      %s37 = sphi 0, %s34
      %s38 = sphi 0, %s35
      %s54 = sphi 0, %s56
      %s57 = sphi 0, %s54
      %s58 = sphi 0, %s57
      %s74 = sphi 0, %s58
      %s80 = sphi 0, %s82
      %s83 = sphi 0, %s80
      %s84 = sphi 0, %s83
      %s100 = sphi 0, %s84
      %s108 = sphi 0, %s110
      %s111 = sphi 0, %s108
      %s112 = sphi 0, %s111
      %s128 = sphi 0, %s112
      %s136 = sphi 0, %s138
      %s139 = sphi 0, %s136
      %s140 = sphi 0, %s139
      %s156 = sphi 0, %s140
      %s166 = sphi 0, %s168
      %s169 = sphi 0, %s166
      %s170 = sphi 0, %s169
      %s186 = sphi 0, %s170
      %s196 = sphi 0, %s198
      %s199 = sphi 0, %s196
      %s200 = sphi 0, %s199
      %s216 = sphi 0, %s200
      %s226 = sphi 0, %s228
      %s229 = sphi 0, %s226
      %s230 = sphi 0, %s229
      %s246 = sphi 0, %s230
    $region4: #{tpu_custom_call.1} parent=1 // loop_header_branch
      %26 = sbr.rel (%p24) target = $region8
    $region5: #{tpu_custom_call.1} parent=1 // loop_body
      %s28 = ssub.s32 %s23, 1
      %s29 = ssub.s32 %s23, 2
      %s39 = sadd.s32 1, %s32
      %p40 = scmp.ge.s32.totalorder %s39, 2
      %s41 = scalar_select %p40, 0, %s39
      %s42 = sadd.s32 1, %s31
      %s43 = scalar_select %p40, %s42, %s31
      %p44 = scmp.ge.s32.totalorder %s43, 1
      %s45 = scalar_select %p44, 0, %s43
      %s46 = sadd.s32 1, %s30
      %s47 = scalar_select %p44, %s46, %s30
      %p48 = scmp.ge.s32.totalorder %s47, 2
      %s49 = scalar_select %p48, 0, %s47
      %s50 = ssub.s32 %s30, %s49
      %s51 = ssub.s32 %s32, %s41
      %s52 = sor.u32 %s50, %s51
      %p53 = scmp.eq.s32.totalorder %s52, 0
      %s55 = sadd.s32 %s54, 1
      %s56 = scalar_select %p53, %s54, %s55
      %p59 = pneg %p53
      %p60 = scmp.eq.s32.totalorder %s23, 3
      %p61 = por %p59, %p60
      %p62 = scmp.ne.s32.totalorder %s54, %s57
      %p63 = scmp.eq.s32.totalorder %s23, 0
      %p64 = por %p62, %p63
      %p65 = scmp.ne.s32.totalorder %s54, %s57
      %p66 = scmp.eq.s32.totalorder %s28, 3
      %p67 = por %p65, %p66
      %p68 = scmp.ne.s32.totalorder %s57, %s58
      %p69 = scmp.eq.s32.totalorder %s28, 0
      %p70 = por %p68, %p69
      %p71 = scmp.ne.s32.totalorder %s57, %s58
      %p72 = scmp.eq.s32.totalorder %s29, 3
      %p73 = por %p71, %p72
      %p75 = scmp.ne.s32.totalorder %s58, %s74
      %p76 = scmp.eq.s32.totalorder %s29, 0
      %p77 = por %p75, %p76
      %s78 = ssub.s32 %s31, %s45
      %p79 = scmp.eq.s32.totalorder %s78, 0
      %s81 = sadd.s32 %s80, 1
      %s82 = scalar_select %p79, %s80, %s81
      %p85 = pneg %p79
      %p86 = scmp.eq.s32.totalorder %s23, 3
      %p87 = por %p85, %p86
      %p88 = scmp.ne.s32.totalorder %s80, %s83
      %p89 = scmp.eq.s32.totalorder %s23, 0
      %p90 = por %p88, %p89
      %p91 = scmp.ne.s32.totalorder %s80, %s83
      %p92 = scmp.eq.s32.totalorder %s28, 3
      %p93 = por %p91, %p92
      %p94 = scmp.ne.s32.totalorder %s83, %s84
      %p95 = scmp.eq.s32.totalorder %s28, 0
      %p96 = por %p94, %p95
      %p97 = scmp.ne.s32.totalorder %s83, %s84
      %p98 = scmp.eq.s32.totalorder %s29, 3
      %p99 = por %p97, %p98
      %p101 = scmp.ne.s32.totalorder %s84, %s100
      %p102 = scmp.eq.s32.totalorder %s29, 0
      %p103 = por %p101, %p102
      %s104 = ssub.s32 %s30, %s49
      %s105 = ssub.s32 %s32, %s41
      %s106 = sor.u32 %s104, %s105
      %p107 = scmp.eq.s32.totalorder %s106, 0
      %s109 = sadd.s32 %s108, 1
      %s110 = scalar_select %p107, %s108, %s109
      %p113 = pneg %p107
      %p114 = scmp.eq.s32.totalorder %s23, 3
      %p115 = por %p113, %p114
      %p116 = scmp.ne.s32.totalorder %s108, %s111
      %p117 = scmp.eq.s32.totalorder %s23, 0
      %p118 = por %p116, %p117
      %p119 = scmp.ne.s32.totalorder %s108, %s111
      %p120 = scmp.eq.s32.totalorder %s28, 3
      %p121 = por %p119, %p120
      %p122 = scmp.ne.s32.totalorder %s111, %s112
      %p123 = scmp.eq.s32.totalorder %s28, 0
      %p124 = por %p122, %p123
      %p125 = scmp.ne.s32.totalorder %s111, %s112
      %p126 = scmp.eq.s32.totalorder %s29, 3
      %p127 = por %p125, %p126
      %p129 = scmp.ne.s32.totalorder %s112, %s128
      %p130 = scmp.eq.s32.totalorder %s29, 0
      %p131 = por %p129, %p130
      %s132 = ssub.s32 %s30, %s49
      %s133 = ssub.s32 %s32, %s41
      %s134 = sor.u32 %s132, %s133
      %p135 = scmp.eq.s32.totalorder %s134, 0
      %s137 = sadd.s32 %s136, 1
      %s138 = scalar_select %p135, %s136, %s137
      %p141 = pneg %p135
      %p142 = scmp.eq.s32.totalorder %s23, 3
      %p143 = por %p141, %p142
      %p144 = scmp.ne.s32.totalorder %s136, %s139
      %p145 = scmp.eq.s32.totalorder %s23, 0
      %p146 = por %p144, %p145
      %p147 = scmp.ne.s32.totalorder %s136, %s139
      %p148 = scmp.eq.s32.totalorder %s28, 3
      %p149 = por %p147, %p148
      %p150 = scmp.ne.s32.totalorder %s139, %s140
      %p151 = scmp.eq.s32.totalorder %s28, 0
      %p152 = por %p150, %p151
      %p153 = scmp.ne.s32.totalorder %s139, %s140
      %p154 = scmp.eq.s32.totalorder %s29, 3
      %p155 = por %p153, %p154
      %p157 = scmp.ne.s32.totalorder %s140, %s156
      %p158 = scmp.eq.s32.totalorder %s29, 0
      %p159 = por %p157, %p158
      %s160 = ssub.s32 %s30, %s49
      %s161 = ssub.s32 %s31, %s45
      %s162 = sor.u32 %s160, %s161
      %s163 = ssub.s32 %s32, %s41
      %s164 = sor.u32 %s162, %s163
      %p165 = scmp.eq.s32.totalorder %s164, 0
      %s167 = sadd.s32 %s166, 1
      %s168 = scalar_select %p165, %s166, %s167
      %p171 = pneg %p165
      %p172 = scmp.eq.s32.totalorder %s23, 3
      %p173 = por %p171, %p172
      %p174 = scmp.ne.s32.totalorder %s166, %s169
      %p175 = scmp.eq.s32.totalorder %s23, 0
      %p176 = por %p174, %p175
      %p177 = scmp.ne.s32.totalorder %s166, %s169
      %p178 = scmp.eq.s32.totalorder %s28, 3
      %p179 = por %p177, %p178
      %p180 = scmp.ne.s32.totalorder %s169, %s170
      %p181 = scmp.eq.s32.totalorder %s28, 0
      %p182 = por %p180, %p181
      %p183 = scmp.ne.s32.totalorder %s169, %s170
      %p184 = scmp.eq.s32.totalorder %s29, 3
      %p185 = por %p183, %p184
      %p187 = scmp.ne.s32.totalorder %s170, %s186
      %p188 = scmp.eq.s32.totalorder %s29, 0
      %p189 = por %p187, %p188
      %s190 = ssub.s32 %s30, %s49
      %s191 = ssub.s32 %s31, %s45
      %s192 = sor.u32 %s190, %s191
      %s193 = ssub.s32 %s32, %s41
      %s194 = sor.u32 %s192, %s193
      %p195 = scmp.eq.s32.totalorder %s194, 0
      %s197 = sadd.s32 %s196, 1
      %s198 = scalar_select %p195, %s196, %s197
      %p201 = pneg %p195
      %p202 = scmp.eq.s32.totalorder %s23, 3
      %p203 = por %p201, %p202
      %p204 = scmp.ne.s32.totalorder %s196, %s199
      %p205 = scmp.eq.s32.totalorder %s23, 0
      %p206 = por %p204, %p205
      %p207 = scmp.ne.s32.totalorder %s196, %s199
      %p208 = scmp.eq.s32.totalorder %s28, 3
      %p209 = por %p207, %p208
      %p210 = scmp.ne.s32.totalorder %s199, %s200
      %p211 = scmp.eq.s32.totalorder %s28, 0
      %p212 = por %p210, %p211
      %p213 = scmp.ne.s32.totalorder %s199, %s200
      %p214 = scmp.eq.s32.totalorder %s29, 3
      %p215 = por %p213, %p214
      %p217 = scmp.ne.s32.totalorder %s200, %s216
      %p218 = scmp.eq.s32.totalorder %s29, 0
      %p219 = por %p217, %p218
      %s220 = ssub.s32 %s30, %s49
      %s221 = ssub.s32 %s31, %s45
      %s222 = sor.u32 %s220, %s221
      %s223 = ssub.s32 %s32, %s41
      %s224 = sor.u32 %s222, %s223
      %p225 = scmp.eq.s32.totalorder %s224, 0
      %s227 = sadd.s32 %s226, 1
      %s228 = scalar_select %p225, %s226, %s227
      %p231 = pneg %p225
      %p232 = scmp.eq.s32.totalorder %s23, 3
      %p233 = por %p231, %p232
      %p234 = scmp.ne.s32.totalorder %s226, %s229
      %p235 = scmp.eq.s32.totalorder %s23, 0
      %p236 = por %p234, %p235
      %p237 = scmp.ne.s32.totalorder %s226, %s229
      %p238 = scmp.eq.s32.totalorder %s28, 3
      %p239 = por %p237, %p238
      %p240 = scmp.ne.s32.totalorder %s229, %s230
      %p241 = scmp.eq.s32.totalorder %s28, 0
      %p242 = por %p240, %p241
      %p243 = scmp.ne.s32.totalorder %s229, %s230
      %p244 = scmp.eq.s32.totalorder %s29, 3
      %p245 = por %p243, %p244
      %p247 = scmp.ne.s32.totalorder %s230, %s246
      %p248 = scmp.eq.s32.totalorder %s29, 0
      %p249 = por %p247, %p248
      %p250 = scmp.le.s32.totalorder 1, %s23
      %p251 = scmp.lt.s32.totalorder %s23, 5
      %p252 = pnand %p250, %p251
      %p253 = pneg %p252
      // Predicated region
      $region9: #{tpu_custom_call.1} parent=5 // pred_check
        _
      $region10: #{tpu_custom_call.1} parent=5 // pred_check_branch
        %255 = sbr.rel (%p252) target = $region12
      $region11: #{tpu_custom_call.1} parent=5 // pred_region
        %s256 = ssub.s32 %s23, 1
        // Predicated region
        $region13: #{tpu_custom_call.1} parent=11 // pred_check
          %p257 = pneg %p96
        $region14: #{tpu_custom_call.1} parent=11 // pred_check_branch
          %259 = sbr.rel (%p257) target = $region16
        $region15: #{tpu_custom_call.1} parent=11 // pred_region
          %s261 = ssub.s32 12288, 12288
          %262 = vsyncadd [#allocation6], %s261
          %s263 = smul.addr %s34, 192
          %s264 = smul.addr %s263, 64
          %s265 = scalar_lea.hbm %s1, %s264
          %s266 = sshll.u32 [#allocation5], 4
          %s267 = int_to_ptr.vmem [resolvable:$true] %s266
          %272 = dma.hbm_to_vmem [thread:$0]  %s265, 12288, %s267, [#allocation6], 384, 384, 24
        $region16: #{tpu_custom_call.1} parent=11 // pred_fallthru
          _
      $region12: #{tpu_custom_call.1} parent=5 // pred_fallthru
        _
      %p273 = scmp.lt.s32.totalorder %s23, 4
      // Predicated region
      $region17: #{tpu_custom_call.1} parent=5 // pred_check
        %p274 = pneg %p273
      $region18: #{tpu_custom_call.1} parent=5 // pred_check_branch
        %276 = sbr.rel (%p274) target = $region20
      $region19: #{tpu_custom_call.1} parent=5 // pred_region
        // Predicated region
        $region21: #{tpu_custom_call.1} parent=19 // pred_check
          %p277 = pneg %p64
        $region22: #{tpu_custom_call.1} parent=19 // pred_check_branch
          %279 = sbr.rel (%p277) target = $region24
        $region23: #{tpu_custom_call.1} parent=19 // pred_region
          %s280 = sand.u32 %s23, 1
          %s281 = scalar_lea.sflag [#allocation3], %s280
          %s282 = sand.u32 %s54, 1
          %s283 = smul.addr %s282, 128
          %s284 = scalar_lea.vmem [#allocation2], %s283
          %s285 = smul.u32 16, %s32
          %s287 = ssub.s32 2048, 2048
          %288 = vsyncadd %s281, %s287
          %s289 = smul.addr %s285, 2
          %s290 = smul.addr %s30, 64
          %s291 = sadd.s32 %s289, %s290
          %s292 = smul.addr %s291, 64
          %s293 = scalar_lea.hbm %s0, %s292
          %s294 = sshll.u32 %s284, 4
          %s295 = int_to_ptr.vmem [resolvable:$true] %s294
          %300 = dma.hbm_to_vmem [thread:$0]  %s293, 2048, %s295, %s281, 128, 128, 8
        $region24: #{tpu_custom_call.1} parent=19 // pred_fallthru
          _
        // Predicated region
        $region25: #{tpu_custom_call.1} parent=19 // pred_check
          %p301 = pneg %p118
        $region26: #{tpu_custom_call.1} parent=19 // pred_check_branch
          %303 = sbr.rel (%p301) target = $region28
        $region27: #{tpu_custom_call.1} parent=19 // pred_region
          %s304 = sand.u32 %s23, 1
          %s305 = scalar_lea.sflag [#allocation3], %s304
          %s306 = sand.u32 %s108, 1
          %s307 = smul.addr %s306, 128
          %s308 = scalar_lea.vmem [#allocation7], %s307
          %s309 = smul.u32 16, %s32
          %s311 = ssub.s32 2048, 2048
          %312 = vsyncadd %s305, %s311
          %s313 = smul.addr %s30, 32
          %s314 = sadd.s32 %s309, %s313
          %s315 = smul.addr %s314, 128
          %s316 = scalar_lea.hbm %s2, %s315
          %s317 = sshll.u32 %s308, 4
          %s318 = int_to_ptr.vmem [resolvable:$true] %s317
          %323 = dma.hbm_to_vmem [thread:$0]  %s316, 2048, %s318, %s305, 128, 128, 8
        $region28: #{tpu_custom_call.1} parent=19 // pred_fallthru
          _
        // Predicated region
        $region29: #{tpu_custom_call.1} parent=19 // pred_check
          %p324 = pneg %p146
        $region30: #{tpu_custom_call.1} parent=19 // pred_check_branch
          %326 = sbr.rel (%p324) target = $region32
        $region31: #{tpu_custom_call.1} parent=19 // pred_region
          %s327 = sand.u32 %s23, 1
          %s328 = scalar_lea.sflag [#allocation3], %s327
          %s329 = sand.u32 %s136, 1
          %s330 = smul.addr %s329, 128
          %s331 = scalar_lea.vmem [#allocation8], %s330
          %s332 = smul.u32 16, %s32
          %s334 = ssub.s32 2048, 2048
          %335 = vsyncadd %s328, %s334
          %s336 = smul.addr %s30, 32
          %s337 = sadd.s32 %s332, %s336
          %s338 = smul.addr %s337, 128
          %s339 = scalar_lea.hbm %s3, %s338
          %s340 = sshll.u32 %s331, 4
          %s341 = int_to_ptr.vmem [resolvable:$true] %s340
          %346 = dma.hbm_to_vmem [thread:$0]  %s339, 2048, %s341, %s328, 128, 128, 8
        $region32: #{tpu_custom_call.1} parent=19 // pred_fallthru
          _
      $region20: #{tpu_custom_call.1} parent=5 // pred_fallthru
        _
      %p347 = scmp.le.s32.totalorder 1, %s23
      %p348 = scmp.lt.s32.totalorder %s23, 5
      %p349 = pnand %p347, %p348
      %p350 = pneg %p349
      // Predicated region
      $region33: #{tpu_custom_call.1} parent=5 // pred_check
        _
      $region34: #{tpu_custom_call.1} parent=5 // pred_check_branch
        %352 = sbr.rel (%p349) target = $region36
      $region35: #{tpu_custom_call.1} parent=5 // pred_region
        %s353 = ssub.s32 %s23, 1
        %s354 = sand.u32 %s28, 1
        %s355 = scalar_lea.sflag [#allocation3], %s354
        %s356 = sand.u32 %s57, 1
        %s357 = smul.addr %s356, 128
        %s358 = scalar_lea.vmem [#allocation2], %s357
        // Predicated region
        $region37: #{tpu_custom_call.1} parent=35 // pred_check
          %p359 = pneg %p70
        $region38: #{tpu_custom_call.1} parent=35 // pred_check_branch
          %361 = sbr.rel (%p359) target = $region40
        $region39: #{tpu_custom_call.1} parent=35 // pred_region
          %362 = dma.done %s355, 2048
        $region40: #{tpu_custom_call.1} parent=35 // pred_fallthru
          _
        // Predicated region
        $region41: #{tpu_custom_call.1} parent=35 // pred_check
          %p363 = pneg %p96
        $region42: #{tpu_custom_call.1} parent=35 // pred_check_branch
          %365 = sbr.rel (%p363) target = $region44
        $region43: #{tpu_custom_call.1} parent=35 // pred_region
          %366 = dma.done [#allocation6], 12288
        $region44: #{tpu_custom_call.1} parent=35 // pred_fallthru
          _
        %s367 = sand.u32 %s28, 1
        %s368 = scalar_lea.sflag [#allocation3], %s367
        %s369 = sand.u32 %s111, 1
        %s370 = smul.addr %s369, 128
        %s371 = scalar_lea.vmem [#allocation7], %s370
        // Predicated region
        $region45: #{tpu_custom_call.1} parent=35 // pred_check
          %p372 = pneg %p124
        $region46: #{tpu_custom_call.1} parent=35 // pred_check_branch
          %374 = sbr.rel (%p372) target = $region48
        $region47: #{tpu_custom_call.1} parent=35 // pred_region
          %375 = dma.done %s368, 2048
        $region48: #{tpu_custom_call.1} parent=35 // pred_fallthru
          _
        %s376 = sand.u32 %s28, 1
        %s377 = scalar_lea.sflag [#allocation3], %s376
        %s378 = sand.u32 %s139, 1
        %s379 = smul.addr %s378, 128
        %s380 = scalar_lea.vmem [#allocation8], %s379
        // Predicated region
        $region49: #{tpu_custom_call.1} parent=35 // pred_check
          %p381 = pneg %p152
        $region50: #{tpu_custom_call.1} parent=35 // pred_check_branch
          %383 = sbr.rel (%p381) target = $region52
        $region51: #{tpu_custom_call.1} parent=35 // pred_region
          %384 = dma.done %s377, 2048
        $region52: #{tpu_custom_call.1} parent=35 // pred_fallthru
          _
        %s385 = sand.u32 %s28, 1
        %s386 = scalar_lea.sflag [#allocation3], %s385
        %s387 = sand.u32 %s57, 1
        %s388 = smul.addr %s387, 128
        %s389 = scalar_lea.vmem [#allocation2], %s388
        %p390 = pneg %p70
        %p391 = pneg %p67
        %p392 = pneg %p96
        %p393 = pneg %p93
        %s394 = sand.u32 %s28, 1
        %s395 = scalar_lea.sflag [#allocation3], %s394
        %s396 = sand.u32 %s111, 1
        %s397 = smul.addr %s396, 128
        %s398 = scalar_lea.vmem [#allocation7], %s397
        %p399 = pneg %p124
        %p400 = pneg %p121
        %s401 = sand.u32 %s28, 1
        %s402 = scalar_lea.sflag [#allocation3], %s401
        %s403 = sand.u32 %s139, 1
        %s404 = smul.addr %s403, 128
        %s405 = scalar_lea.vmem [#allocation8], %s404
        %p406 = pneg %p152
        %p407 = pneg %p149
        %p408 = pneg %p182
        %p409 = pneg %p179
        %s410 = sand.u32 %s169, 1
        %s411 = scalar_lea.sflag [#allocation4], %s410
        %s412 = sand.u32 %s169, 1
        %s413 = smul.addr %s412, 128
        %s414 = scalar_lea.vmem [#allocation9], %s413
        %p415 = pneg %p212
        %p416 = pneg %p209
        %s417 = sand.u32 %s28, 1
        %s418 = scalar_lea.sflag [#allocation11], %s417
        %s419 = sand.u32 %s199, 1
        %s420 = smul.addr %s419, 128
        %s421 = scalar_lea.vmem [#allocation10], %s420
        %p422 = pneg %p242
        %p423 = pneg %p239
        %s424 = sand.u32 %s28, 1
        %s425 = scalar_lea.sflag [#allocation11], %s424
        %s426 = sand.u32 %s229, 1
        %s427 = smul.addr %s426, 128
        %s428 = scalar_lea.vmem [#allocation12], %s427
        %s429 = smul.u32 16, %s35
        %s430 = smul.u32 16, %s35
        %s431 = smul.u32 16, %s35
        %s432 = smul.u32 2, %s34
        %s433 = smul.u32 16, %s35
        %s434 = smul.u32 2, %s34
        %s435 = smul.u32 2, %s34
        %s436 = smul.u32 16, %s35
        %v437 = vld [vmem:[%s358] sm:$0xff]
        %v438 = vld [vmem:[%s358 + $0x8] sm:$0xff]
        %v439 = vld [vmem:[%s358 + $0x10] sm:$0xff]
        %v440 = vld [vmem:[%s358 + $0x18] sm:$0xff]
        %v441 = vld [vmem:[%s358 + $0x20] sm:$0xff]
        %v442 = vld [vmem:[%s358 + $0x28] sm:$0xff]
        %v443 = vld [vmem:[%s358 + $0x30] sm:$0xff]
        %v444 = vld [vmem:[%s358 + $0x38] sm:$0xff]
        %v445 = vld [vmem:[%s358 + $0x40] sm:$0xff]
        %v446 = vld [vmem:[%s358 + $0x48] sm:$0xff]
        %v447 = vld [vmem:[%s358 + $0x50] sm:$0xff]
        %v448 = vld [vmem:[%s358 + $0x58] sm:$0xff]
        %v449 = vld [vmem:[%s358 + $0x60] sm:$0xff]
        %v450 = vld [vmem:[%s358 + $0x68] sm:$0xff]
        %v451 = vld [vmem:[%s358 + $0x70] sm:$0xff]
        %v452 = vld [vmem:[%s358 + $0x78] sm:$0xff]
        %v453 = vld [vmem:[#allocation5] sm:$0xff]
        %v454 = vld [vmem:[#allocation5 + $0x8] sm:$0xff]
        %v455 = vld [vmem:[#allocation5 + $0x10] sm:$0xff]
        %v456 = vld [vmem:[#allocation5 + $0x18] sm:$0xff]
        %v457 = vld [vmem:[#allocation5 + $0x20] sm:$0xff]
        %v458 = vld [vmem:[#allocation5 + $0x28] sm:$0xff]
        %v459 = vld [vmem:[#allocation5 + $0x30] sm:$0xff]
        %v460 = vld [vmem:[#allocation5 + $0x38] sm:$0xff]
        %v461 = vld [vmem:[#allocation5 + $0x40] sm:$0xff]
        %v462 = vld [vmem:[#allocation5 + $0x48] sm:$0xff]
        %v463 = vld [vmem:[#allocation5 + $0x50] sm:$0xff]
        %v464 = vld [vmem:[#allocation5 + $0x58] sm:$0xff]
        %v465 = vld [vmem:[#allocation5 + $0x60] sm:$0xff]
        %v466 = vld [vmem:[#allocation5 + $0x68] sm:$0xff]
        %v467 = vld [vmem:[#allocation5 + $0x70] sm:$0xff]
        %v468 = vld [vmem:[#allocation5 + $0x78] sm:$0xff]
        %v469 = vld [vmem:[#allocation5 + $0x80] sm:$0xff]
        %v470 = vld [vmem:[#allocation5 + $0x88] sm:$0xff]
        %v471 = vld [vmem:[#allocation5 + $0x90] sm:$0xff]
        %v472 = vld [vmem:[#allocation5 + $0x98] sm:$0xff]
        %v473 = vld [vmem:[#allocation5 + $0xa0] sm:$0xff]
        %v474 = vld [vmem:[#allocation5 + $0xa8] sm:$0xff]
        %v475 = vld [vmem:[#allocation5 + $0xb0] sm:$0xff]
        %v476 = vld [vmem:[#allocation5 + $0xb8] sm:$0xff]
        %v477 = vld [vmem:[#allocation5 + $0xc0] sm:$0xff]
        %v478 = vld [vmem:[#allocation5 + $0xc8] sm:$0xff]
        %v479 = vld [vmem:[#allocation5 + $0xd0] sm:$0xff]
        %v480 = vld [vmem:[#allocation5 + $0xd8] sm:$0xff]
        %v481 = vld [vmem:[#allocation5 + $0xe0] sm:$0xff]
        %v482 = vld [vmem:[#allocation5 + $0xe8] sm:$0xff]
        %v483 = vld [vmem:[#allocation5 + $0xf0] sm:$0xff]
        %v484 = vld [vmem:[#allocation5 + $0xf8] sm:$0xff]
        %v485 = vld [vmem:[#allocation5 + $0x100] sm:$0xff]
        %v486 = vld [vmem:[#allocation5 + $0x108] sm:$0xff]
        %v487 = vld [vmem:[#allocation5 + $0x110] sm:$0xff]
        %v488 = vld [vmem:[#allocation5 + $0x118] sm:$0xff]
        %v489 = vld [vmem:[#allocation5 + $0x120] sm:$0xff]
        %v490 = vld [vmem:[#allocation5 + $0x128] sm:$0xff]
        %v491 = vld [vmem:[#allocation5 + $0x130] sm:$0xff]
        %v492 = vld [vmem:[#allocation5 + $0x138] sm:$0xff]
        %v493 = vld [vmem:[#allocation5 + $0x140] sm:$0xff]
        %v494 = vld [vmem:[#allocation5 + $0x148] sm:$0xff]
        %v495 = vld [vmem:[#allocation5 + $0x150] sm:$0xff]
        %v496 = vld [vmem:[#allocation5 + $0x158] sm:$0xff]
        %v497 = vld [vmem:[#allocation5 + $0x160] sm:$0xff]
        %v498 = vld [vmem:[#allocation5 + $0x168] sm:$0xff]
        %v499 = vld [vmem:[#allocation5 + $0x170] sm:$0xff]
        %v500 = vld [vmem:[#allocation5 + $0x178] sm:$0xff]
        %v501 = vld [vmem:[#allocation5 + $0x180] sm:$0xff]
        %v502 = vld [vmem:[#allocation5 + $0x188] sm:$0xff]
        %v503 = vld [vmem:[#allocation5 + $0x190] sm:$0xff]
        %v504 = vld [vmem:[#allocation5 + $0x198] sm:$0xff]
        %v505 = vld [vmem:[#allocation5 + $0x1a0] sm:$0xff]
        %v506 = vld [vmem:[#allocation5 + $0x1a8] sm:$0xff]
        %v507 = vld [vmem:[#allocation5 + $0x1b0] sm:$0xff]
        %v508 = vld [vmem:[#allocation5 + $0x1b8] sm:$0xff]
        %v509 = vld [vmem:[#allocation5 + $0x1c0] sm:$0xff]
        %v510 = vld [vmem:[#allocation5 + $0x1c8] sm:$0xff]
        %v511 = vld [vmem:[#allocation5 + $0x1d0] sm:$0xff]
        %v512 = vld [vmem:[#allocation5 + $0x1d8] sm:$0xff]
        %v513 = vld [vmem:[#allocation5 + $0x1e0] sm:$0xff]
        %v514 = vld [vmem:[#allocation5 + $0x1e8] sm:$0xff]
        %v515 = vld [vmem:[#allocation5 + $0x1f0] sm:$0xff]
        %v516 = vld [vmem:[#allocation5 + $0x1f8] sm:$0xff]
        %v517 = vld [vmem:[#allocation5 + $0x200] sm:$0xff]
        %v518 = vld [vmem:[#allocation5 + $0x208] sm:$0xff]
        %v519 = vld [vmem:[#allocation5 + $0x210] sm:$0xff]
        %v520 = vld [vmem:[#allocation5 + $0x218] sm:$0xff]
        %v521 = vld [vmem:[#allocation5 + $0x220] sm:$0xff]
        %v522 = vld [vmem:[#allocation5 + $0x228] sm:$0xff]
        %v523 = vld [vmem:[#allocation5 + $0x230] sm:$0xff]
        %v524 = vld [vmem:[#allocation5 + $0x238] sm:$0xff]
        %v525 = vld [vmem:[#allocation5 + $0x240] sm:$0xff]
        %v526 = vld [vmem:[#allocation5 + $0x248] sm:$0xff]
        %v527 = vld [vmem:[#allocation5 + $0x250] sm:$0xff]
        %v528 = vld [vmem:[#allocation5 + $0x258] sm:$0xff]
        %v529 = vld [vmem:[#allocation5 + $0x260] sm:$0xff]
        %v530 = vld [vmem:[#allocation5 + $0x268] sm:$0xff]
        %v531 = vld [vmem:[#allocation5 + $0x270] sm:$0xff]
        %v532 = vld [vmem:[#allocation5 + $0x278] sm:$0xff]
        %v533 = vld [vmem:[#allocation5 + $0x280] sm:$0xff]
        %v534 = vld [vmem:[#allocation5 + $0x288] sm:$0xff]
        %v535 = vld [vmem:[#allocation5 + $0x290] sm:$0xff]
        %v536 = vld [vmem:[#allocation5 + $0x298] sm:$0xff]
        %v537 = vld [vmem:[#allocation5 + $0x2a0] sm:$0xff]
        %v538 = vld [vmem:[#allocation5 + $0x2a8] sm:$0xff]
        %v539 = vld [vmem:[#allocation5 + $0x2b0] sm:$0xff]
        %v540 = vld [vmem:[#allocation5 + $0x2b8] sm:$0xff]
        %v541 = vld [vmem:[#allocation5 + $0x2c0] sm:$0xff]
        %v542 = vld [vmem:[#allocation5 + $0x2c8] sm:$0xff]
        %v543 = vld [vmem:[#allocation5 + $0x2d0] sm:$0xff]
        %v544 = vld [vmem:[#allocation5 + $0x2d8] sm:$0xff]
        %v545 = vld [vmem:[#allocation5 + $0x2e0] sm:$0xff]
        %v546 = vld [vmem:[#allocation5 + $0x2e8] sm:$0xff]
        %v547 = vld [vmem:[#allocation5 + $0x2f0] sm:$0xff]
        %v548 = vld [vmem:[#allocation5 + $0x2f8] sm:$0xff]
        %v565 = vunpack.c.l.b16 %v437
        %v566 = vunpack.c.h.b16 %v437
        %v567 = vunpack.c.l.b16 %v438
        %v568 = vunpack.c.h.b16 %v438
        %v569 = vunpack.c.l.b16 %v439
        %v570 = vunpack.c.h.b16 %v439
        %v571 = vunpack.c.l.b16 %v440
        %v572 = vunpack.c.h.b16 %v440
        %v573 = vunpack.c.l.b16 %v441
        %v574 = vunpack.c.h.b16 %v441
        %v575 = vunpack.c.l.b16 %v442
        %v576 = vunpack.c.h.b16 %v442
        %v577 = vunpack.c.l.b16 %v443
        %v578 = vunpack.c.h.b16 %v443
        %v579 = vunpack.c.l.b16 %v444
        %v580 = vunpack.c.h.b16 %v444
        %v581 = vunpack.c.l.b16 %v445
        %v582 = vunpack.c.h.b16 %v445
        %v583 = vunpack.c.l.b16 %v446
        %v584 = vunpack.c.h.b16 %v446
        %v585 = vunpack.c.l.b16 %v447
        %v586 = vunpack.c.h.b16 %v447
        %v587 = vunpack.c.l.b16 %v448
        %v588 = vunpack.c.h.b16 %v448
        %v589 = vunpack.c.l.b16 %v449
        %v590 = vunpack.c.h.b16 %v449
        %v591 = vunpack.c.l.b16 %v450
        %v592 = vunpack.c.h.b16 %v450
        %v593 = vunpack.c.l.b16 %v451
        %v594 = vunpack.c.h.b16 %v451
        %v595 = vunpack.c.l.b16 %v452
        %v596 = vunpack.c.h.b16 %v452
        %v597 = vpack.c.b16 %v567, %v565
        %v598 = vpack.c.b16 %v568, %v566
        %v599 = vpack.c.b16 %v571, %v569
        %v600 = vpack.c.b16 %v572, %v570
        %v601 = vpack.c.b16 %v575, %v573
        %v602 = vpack.c.b16 %v576, %v574
        %v603 = vpack.c.b16 %v579, %v577
        %v604 = vpack.c.b16 %v580, %v578
        %v605 = vpack.c.b16 %v583, %v581
        %v606 = vpack.c.b16 %v584, %v582
        %v607 = vpack.c.b16 %v587, %v585
        %v608 = vpack.c.b16 %v588, %v586
        %v609 = vpack.c.b16 %v591, %v589
        %v610 = vpack.c.b16 %v592, %v590
        %v611 = vpack.c.b16 %v595, %v593
        %v612 = vpack.c.b16 %v596, %v594
        %v725 = vunpack.c.l.b16 %v453
        %v726 = vunpack.c.h.b16 %v453
        %v727 = vunpack.c.l.b16 %v454
        %v728 = vunpack.c.h.b16 %v454
        %v729 = vunpack.c.l.b16 %v455
        %v730 = vunpack.c.h.b16 %v455
        %v731 = vunpack.c.l.b16 %v456
        %v732 = vunpack.c.h.b16 %v456
        %v733 = vunpack.c.l.b16 %v457
        %v734 = vunpack.c.h.b16 %v457
        %v735 = vunpack.c.l.b16 %v458
        %v736 = vunpack.c.h.b16 %v458
        %v737 = vunpack.c.l.b16 %v459
        %v738 = vunpack.c.h.b16 %v459
        %v739 = vunpack.c.l.b16 %v460
        %v740 = vunpack.c.h.b16 %v460
        %v741 = vunpack.c.l.b16 %v461
        %v742 = vunpack.c.h.b16 %v461
        %v743 = vunpack.c.l.b16 %v462
        %v744 = vunpack.c.h.b16 %v462
        %v745 = vunpack.c.l.b16 %v463
        %v746 = vunpack.c.h.b16 %v463
        %v747 = vunpack.c.l.b16 %v464
        %v748 = vunpack.c.h.b16 %v464
        %v749 = vunpack.c.l.b16 %v465
        %v750 = vunpack.c.h.b16 %v465
        %v751 = vunpack.c.l.b16 %v466
        %v752 = vunpack.c.h.b16 %v466
        %v753 = vunpack.c.l.b16 %v467
        %v754 = vunpack.c.h.b16 %v467
        %v755 = vunpack.c.l.b16 %v468
        %v756 = vunpack.c.h.b16 %v468
        %v757 = vunpack.c.l.b16 %v469
        %v758 = vunpack.c.h.b16 %v469
        %v759 = vunpack.c.l.b16 %v470
        %v760 = vunpack.c.h.b16 %v470
        %v761 = vunpack.c.l.b16 %v471
        %v762 = vunpack.c.h.b16 %v471
        %v763 = vunpack.c.l.b16 %v472
        %v764 = vunpack.c.h.b16 %v472
        %v765 = vunpack.c.l.b16 %v473
        %v766 = vunpack.c.h.b16 %v473
        %v767 = vunpack.c.l.b16 %v474
        %v768 = vunpack.c.h.b16 %v474
        %v769 = vunpack.c.l.b16 %v475
        %v770 = vunpack.c.h.b16 %v475
        %v771 = vunpack.c.l.b16 %v476
        %v772 = vunpack.c.h.b16 %v476
        %v773 = vunpack.c.l.b16 %v477
        %v774 = vunpack.c.h.b16 %v477
        %v775 = vunpack.c.l.b16 %v478
        %v776 = vunpack.c.h.b16 %v478
        %v777 = vunpack.c.l.b16 %v479
        %v778 = vunpack.c.h.b16 %v479
        %v779 = vunpack.c.l.b16 %v480
        %v780 = vunpack.c.h.b16 %v480
        %v781 = vunpack.c.l.b16 %v481
        %v782 = vunpack.c.h.b16 %v481
        %v783 = vunpack.c.l.b16 %v482
        %v784 = vunpack.c.h.b16 %v482
        %v785 = vunpack.c.l.b16 %v483
        %v786 = vunpack.c.h.b16 %v483
        %v787 = vunpack.c.l.b16 %v484
        %v788 = vunpack.c.h.b16 %v484
        %v789 = vunpack.c.l.b16 %v485
        %v790 = vunpack.c.h.b16 %v485
        %v791 = vunpack.c.l.b16 %v486
        %v792 = vunpack.c.h.b16 %v486
        %v793 = vunpack.c.l.b16 %v487
        %v794 = vunpack.c.h.b16 %v487
        %v795 = vunpack.c.l.b16 %v488
        %v796 = vunpack.c.h.b16 %v488
        %v797 = vunpack.c.l.b16 %v489
        %v798 = vunpack.c.h.b16 %v489
        %v799 = vunpack.c.l.b16 %v490
        %v800 = vunpack.c.h.b16 %v490
        %v801 = vunpack.c.l.b16 %v491
        %v802 = vunpack.c.h.b16 %v491
        %v803 = vunpack.c.l.b16 %v492
        %v804 = vunpack.c.h.b16 %v492
        %v805 = vunpack.c.l.b16 %v493
        %v806 = vunpack.c.h.b16 %v493
        %v807 = vunpack.c.l.b16 %v494
        %v808 = vunpack.c.h.b16 %v494
        %v809 = vunpack.c.l.b16 %v495
        %v810 = vunpack.c.h.b16 %v495
        %v811 = vunpack.c.l.b16 %v496
        %v812 = vunpack.c.h.b16 %v496
        %v813 = vunpack.c.l.b16 %v497
        %v814 = vunpack.c.h.b16 %v497
        %v815 = vunpack.c.l.b16 %v498
        %v816 = vunpack.c.h.b16 %v498
        %v817 = vunpack.c.l.b16 %v499
        %v818 = vunpack.c.h.b16 %v499
        %v819 = vunpack.c.l.b16 %v500
        %v820 = vunpack.c.h.b16 %v500
        %v821 = vunpack.c.l.b16 %v501
        %v822 = vunpack.c.h.b16 %v501
        %v823 = vunpack.c.l.b16 %v502
        %v824 = vunpack.c.h.b16 %v502
        %v825 = vunpack.c.l.b16 %v503
        %v826 = vunpack.c.h.b16 %v503
        %v827 = vunpack.c.l.b16 %v504
        %v828 = vunpack.c.h.b16 %v504
        %v829 = vunpack.c.l.b16 %v505
        %v830 = vunpack.c.h.b16 %v505
        %v831 = vunpack.c.l.b16 %v506
        %v832 = vunpack.c.h.b16 %v506
        %v833 = vunpack.c.l.b16 %v507
        %v834 = vunpack.c.h.b16 %v507
        %v835 = vunpack.c.l.b16 %v508
        %v836 = vunpack.c.h.b16 %v508
        %v837 = vunpack.c.l.b16 %v509
        %v838 = vunpack.c.h.b16 %v509
        %v839 = vunpack.c.l.b16 %v510
        %v840 = vunpack.c.h.b16 %v510
        %v841 = vunpack.c.l.b16 %v511
        %v842 = vunpack.c.h.b16 %v511
        %v843 = vunpack.c.l.b16 %v512
        %v844 = vunpack.c.h.b16 %v512
        %v845 = vunpack.c.l.b16 %v513
        %v846 = vunpack.c.h.b16 %v513
        %v847 = vunpack.c.l.b16 %v514
        %v848 = vunpack.c.h.b16 %v514
        %v849 = vunpack.c.l.b16 %v515
        %v850 = vunpack.c.h.b16 %v515
        %v851 = vunpack.c.l.b16 %v516
        %v852 = vunpack.c.h.b16 %v516
        %v853 = vunpack.c.l.b16 %v517
        %v854 = vunpack.c.h.b16 %v517
        %v855 = vunpack.c.l.b16 %v518
        %v856 = vunpack.c.h.b16 %v518
        %v857 = vunpack.c.l.b16 %v519
        %v858 = vunpack.c.h.b16 %v519
        %v859 = vunpack.c.l.b16 %v520
        %v860 = vunpack.c.h.b16 %v520
        %v861 = vunpack.c.l.b16 %v521
        %v862 = vunpack.c.h.b16 %v521
        %v863 = vunpack.c.l.b16 %v522
        %v864 = vunpack.c.h.b16 %v522
        %v865 = vunpack.c.l.b16 %v523
        %v866 = vunpack.c.h.b16 %v523
        %v867 = vunpack.c.l.b16 %v524
        %v868 = vunpack.c.h.b16 %v524
        %v869 = vunpack.c.l.b16 %v525
        %v870 = vunpack.c.h.b16 %v525
        %v871 = vunpack.c.l.b16 %v526
        %v872 = vunpack.c.h.b16 %v526
        %v873 = vunpack.c.l.b16 %v527
        %v874 = vunpack.c.h.b16 %v527
        %v875 = vunpack.c.l.b16 %v528
        %v876 = vunpack.c.h.b16 %v528
        %v877 = vunpack.c.l.b16 %v529
        %v878 = vunpack.c.h.b16 %v529
        %v879 = vunpack.c.l.b16 %v530
        %v880 = vunpack.c.h.b16 %v530
        %v881 = vunpack.c.l.b16 %v531
        %v882 = vunpack.c.h.b16 %v531
        %v883 = vunpack.c.l.b16 %v532
        %v884 = vunpack.c.h.b16 %v532
        %v885 = vunpack.c.l.b16 %v533
        %v886 = vunpack.c.h.b16 %v533
        %v887 = vunpack.c.l.b16 %v534
        %v888 = vunpack.c.h.b16 %v534
        %v889 = vunpack.c.l.b16 %v535
        %v890 = vunpack.c.h.b16 %v535
        %v891 = vunpack.c.l.b16 %v536
        %v892 = vunpack.c.h.b16 %v536
        %v893 = vunpack.c.l.b16 %v537
        %v894 = vunpack.c.h.b16 %v537
        %v895 = vunpack.c.l.b16 %v538
        %v896 = vunpack.c.h.b16 %v538
        %v897 = vunpack.c.l.b16 %v539
        %v898 = vunpack.c.h.b16 %v539
        %v899 = vunpack.c.l.b16 %v540
        %v900 = vunpack.c.h.b16 %v540
        %v901 = vunpack.c.l.b16 %v541
        %v902 = vunpack.c.h.b16 %v541
        %v903 = vunpack.c.l.b16 %v542
        %v904 = vunpack.c.h.b16 %v542
        %v905 = vunpack.c.l.b16 %v543
        %v906 = vunpack.c.h.b16 %v543
        %v907 = vunpack.c.l.b16 %v544
        %v908 = vunpack.c.h.b16 %v544
        %v909 = vunpack.c.l.b16 %v545
        %v910 = vunpack.c.h.b16 %v545
        %v911 = vunpack.c.l.b16 %v546
        %v912 = vunpack.c.h.b16 %v546
        %v913 = vunpack.c.l.b16 %v547
        %v914 = vunpack.c.h.b16 %v547
        %v915 = vunpack.c.l.b16 %v548
        %v916 = vunpack.c.h.b16 %v548
        %v917 = vpack.c.b16 %v731, %v725
        %v918 = vpack.c.b16 %v732, %v726
        %v919 = vpack.c.b16 %v733, %v727
        %v920 = vpack.c.b16 %v734, %v728
        %v921 = vpack.c.b16 %v735, %v729
        %v922 = vpack.c.b16 %v736, %v730
        %v923 = vpack.c.b16 %v743, %v737
        %v924 = vpack.c.b16 %v744, %v738
        %v925 = vpack.c.b16 %v745, %v739
        %v926 = vpack.c.b16 %v746, %v740
        %v927 = vpack.c.b16 %v747, %v741
        %v928 = vpack.c.b16 %v748, %v742
        %v929 = vpack.c.b16 %v755, %v749
        %v930 = vpack.c.b16 %v756, %v750
        %v931 = vpack.c.b16 %v757, %v751
        %v932 = vpack.c.b16 %v758, %v752
        %v933 = vpack.c.b16 %v759, %v753
        %v934 = vpack.c.b16 %v760, %v754
        %v935 = vpack.c.b16 %v767, %v761
        %v936 = vpack.c.b16 %v768, %v762
        %v937 = vpack.c.b16 %v769, %v763
        %v938 = vpack.c.b16 %v770, %v764
        %v939 = vpack.c.b16 %v771, %v765
        %v940 = vpack.c.b16 %v772, %v766
        %v941 = vpack.c.b16 %v779, %v773
        %v942 = vpack.c.b16 %v780, %v774
        %v943 = vpack.c.b16 %v781, %v775
        %v944 = vpack.c.b16 %v782, %v776
        %v945 = vpack.c.b16 %v783, %v777
        %v946 = vpack.c.b16 %v784, %v778
        %v947 = vpack.c.b16 %v791, %v785
        %v948 = vpack.c.b16 %v792, %v786
        %v949 = vpack.c.b16 %v793, %v787
        %v950 = vpack.c.b16 %v794, %v788
        %v951 = vpack.c.b16 %v795, %v789
        %v952 = vpack.c.b16 %v796, %v790
        %v953 = vpack.c.b16 %v803, %v797
        %v954 = vpack.c.b16 %v804, %v798
        %v955 = vpack.c.b16 %v805, %v799
        %v956 = vpack.c.b16 %v806, %v800
        %v957 = vpack.c.b16 %v807, %v801
        %v958 = vpack.c.b16 %v808, %v802
        %v959 = vpack.c.b16 %v815, %v809
        %v960 = vpack.c.b16 %v816, %v810
        %v961 = vpack.c.b16 %v817, %v811
        %v962 = vpack.c.b16 %v818, %v812
        %v963 = vpack.c.b16 %v819, %v813
        %v964 = vpack.c.b16 %v820, %v814
        %v965 = vpack.c.b16 %v827, %v821
        %v966 = vpack.c.b16 %v828, %v822
        %v967 = vpack.c.b16 %v829, %v823
        %v968 = vpack.c.b16 %v830, %v824
        %v969 = vpack.c.b16 %v831, %v825
        %v970 = vpack.c.b16 %v832, %v826
        %v971 = vpack.c.b16 %v839, %v833
        %v972 = vpack.c.b16 %v840, %v834
        %v973 = vpack.c.b16 %v841, %v835
        %v974 = vpack.c.b16 %v842, %v836
        %v975 = vpack.c.b16 %v843, %v837
        %v976 = vpack.c.b16 %v844, %v838
        %v977 = vpack.c.b16 %v851, %v845
        %v978 = vpack.c.b16 %v852, %v846
        %v979 = vpack.c.b16 %v853, %v847
        %v980 = vpack.c.b16 %v854, %v848
        %v981 = vpack.c.b16 %v855, %v849
        %v982 = vpack.c.b16 %v856, %v850
        %v983 = vpack.c.b16 %v863, %v857
        %v984 = vpack.c.b16 %v864, %v858
        %v985 = vpack.c.b16 %v865, %v859
        %v986 = vpack.c.b16 %v866, %v860
        %v987 = vpack.c.b16 %v867, %v861
        %v988 = vpack.c.b16 %v868, %v862
        %v989 = vpack.c.b16 %v875, %v869
        %v990 = vpack.c.b16 %v876, %v870
        %v991 = vpack.c.b16 %v877, %v871
        %v992 = vpack.c.b16 %v878, %v872
        %v993 = vpack.c.b16 %v879, %v873
        %v994 = vpack.c.b16 %v880, %v874
        %v995 = vpack.c.b16 %v887, %v881
        %v996 = vpack.c.b16 %v888, %v882
        %v997 = vpack.c.b16 %v889, %v883
        %v998 = vpack.c.b16 %v890, %v884
        %v999 = vpack.c.b16 %v891, %v885
        %v1000 = vpack.c.b16 %v892, %v886
        %v1001 = vpack.c.b16 %v899, %v893
        %v1002 = vpack.c.b16 %v900, %v894
        %v1003 = vpack.c.b16 %v901, %v895
        %v1004 = vpack.c.b16 %v902, %v896
        %v1005 = vpack.c.b16 %v903, %v897
        %v1006 = vpack.c.b16 %v904, %v898
        %v1007 = vpack.c.b16 %v911, %v905
        %v1008 = vpack.c.b16 %v912, %v906
        %v1009 = vpack.c.b16 %v913, %v907
        %v1010 = vpack.c.b16 %v914, %v908
        %v1011 = vpack.c.b16 %v915, %v909
        %v1012 = vpack.c.b16 %v916, %v910
        %1109 = vmatprep.subr.bf16.mxu0 %v918
        %1110 = vmatpush1.bf16.msra.mxu0 %v917
        %1111 = vmatprep.subr.bf16.mxu0 %v924
        %1112 = vmatpush1.bf16.msra.mxu0 %v923
        %1113 = vmatprep.subr.bf16.mxu0 %v930
        %1114 = vmatpush1.bf16.msra.mxu0 %v929
        %1115 = vmatprep.subr.bf16.mxu0 %v936
        %1116 = vmatpush1.bf16.msra.mxu0 %v935
        %1117 = vmatprep.subr.bf16.mxu0 %v942
        %1118 = vmatpush1.bf16.msra.mxu0 %v941
        %1119 = vmatprep.subr.bf16.mxu0 %v948
        %1120 = vmatpush1.bf16.msra.mxu0 %v947
        %1121 = vmatprep.subr.bf16.mxu0 %v954
        %1122 = vmatpush1.bf16.msra.mxu0 %v953
        %1123 = vmatprep.subr.bf16.mxu0 %v960
        %1124 = vmatpush1.bf16.msra.mxu0 %v959
        %1125 = vmatprep.subr.bf16.mxu0 %v966
        %1126 = vmatpush1.bf16.msra.mxu0 %v965
        %1127 = vmatprep.subr.bf16.mxu0 %v972
        %1128 = vmatpush1.bf16.msra.mxu0 %v971
        %1129 = vmatprep.subr.bf16.mxu0 %v978
        %1130 = vmatpush1.bf16.msra.mxu0 %v977
        %1131 = vmatprep.subr.bf16.mxu0 %v984
        %1132 = vmatpush1.bf16.msra.mxu0 %v983
        %1133 = vmatprep.subr.bf16.mxu0 %v990
        %1134 = vmatpush1.bf16.msra.mxu0 %v989
        %1135 = vmatprep.subr.bf16.mxu0 %v996
        %1136 = vmatpush1.bf16.msra.mxu0 %v995
        %1137 = vmatprep.subr.bf16.mxu0 %v1002
        %1138 = vmatpush1.bf16.msra.mxu0 %v1001
        %1139 = vmatprep.subr.bf16.mxu0 %v1008
        %1140 = vmatpush1.bf16.msra.mxu0 %v1007
        %1141 = vmatprep.mubr.bf16.mxu0 %v598
        %1142 = vmatmul.mubr.bf16.gmra.mrb[0].mxu0 %v597
        %v1143 = vpop.f32.mrb[0].mxu0
        %v1144 = vadd.f32 0.0, %v1143
        %v1145 = vpop.f32.mrb[0].mxu0
        %v1146 = vadd.f32 0.0, %v1145
        %v1147 = vpop.f32.mrb[0].mxu0
        %v1148 = vadd.f32 0.0, %v1147
        %v1149 = vpop.f32.mrb[0].mxu0
        %v1150 = vadd.f32 0.0, %v1149
        %1151 = vmatprep.mubr.bf16.mxu0 %v600
        %1152 = vmatmul.mubr.bf16.gmra.mrb[0].mxu0 %v599
        %v1153 = vpop.f32.mrb[0].mxu0
        %v1154 = vadd.f32 0.0, %v1153
        %v1155 = vpop.f32.mrb[0].mxu0
        %v1156 = vadd.f32 0.0, %v1155
        %v1157 = vpop.f32.mrb[0].mxu0
        %v1158 = vadd.f32 0.0, %v1157
        %v1159 = vpop.f32.mrb[0].mxu0
        %v1160 = vadd.f32 0.0, %v1159
        %1161 = vmatprep.mubr.bf16.mxu0 %v602
        %1162 = vmatmul.mubr.bf16.gmra.mrb[0].mxu0 %v601
        %v1163 = vpop.f32.mrb[0].mxu0
        %v1164 = vadd.f32 0.0, %v1163
        %v1165 = vpop.f32.mrb[0].mxu0
        %v1166 = vadd.f32 0.0, %v1165
        %v1167 = vpop.f32.mrb[0].mxu0
        %v1168 = vadd.f32 0.0, %v1167
        %v1169 = vpop.f32.mrb[0].mxu0
        %v1170 = vadd.f32 0.0, %v1169
        %1171 = vmatprep.mubr.bf16.mxu0 %v604
        %1172 = vmatmul.mubr.bf16.gmra.mrb[0].mxu0 %v603
        %v1173 = vpop.f32.mrb[0].mxu0
        %v1174 = vadd.f32 0.0, %v1173
        %v1175 = vpop.f32.mrb[0].mxu0
        %v1176 = vadd.f32 0.0, %v1175
        %v1177 = vpop.f32.mrb[0].mxu0
        %v1178 = vadd.f32 0.0, %v1177
        %v1179 = vpop.f32.mrb[0].mxu0
        %v1180 = vadd.f32 0.0, %v1179
        %1181 = vmatprep.mubr.bf16.mxu0 %v606
        %1182 = vmatmul.mubr.bf16.gmra.mrb[0].mxu0 %v605
        %v1183 = vpop.f32.mrb[0].mxu0
        %v1184 = vadd.f32 0.0, %v1183
        %v1185 = vpop.f32.mrb[0].mxu0
        %v1186 = vadd.f32 0.0, %v1185
        %v1187 = vpop.f32.mrb[0].mxu0
        %v1188 = vadd.f32 0.0, %v1187
        %v1189 = vpop.f32.mrb[0].mxu0
        %v1190 = vadd.f32 0.0, %v1189
        %1191 = vmatprep.mubr.bf16.mxu0 %v608
        %1192 = vmatmul.mubr.bf16.gmra.mrb[0].mxu0 %v607
        %v1193 = vpop.f32.mrb[0].mxu0
        %v1194 = vadd.f32 0.0, %v1193
        %v1195 = vpop.f32.mrb[0].mxu0
        %v1196 = vadd.f32 0.0, %v1195
        %v1197 = vpop.f32.mrb[0].mxu0
        %v1198 = vadd.f32 0.0, %v1197
        %v1199 = vpop.f32.mrb[0].mxu0
        %v1200 = vadd.f32 0.0, %v1199
        %1201 = vmatprep.mubr.bf16.mxu0 %v610
        %1202 = vmatmul.mubr.bf16.gmra.mrb[0].mxu0 %v609
        %v1203 = vpop.f32.mrb[0].mxu0
        %v1204 = vadd.f32 0.0, %v1203
        %v1205 = vpop.f32.mrb[0].mxu0
        %v1206 = vadd.f32 0.0, %v1205
        %v1207 = vpop.f32.mrb[0].mxu0
        %v1208 = vadd.f32 0.0, %v1207
        %v1209 = vpop.f32.mrb[0].mxu0
        %v1210 = vadd.f32 0.0, %v1209
        %1211 = vmatprep.mubr.bf16.mxu0 %v612
        %1212 = vmatmul.mubr.bf16.gmra.mrb[0].mxu0 %v611
        %v1213 = vpop.f32.mrb[0].mxu0
        %v1214 = vadd.f32 0.0, %v1213
        %v1215 = vpop.f32.mrb[0].mxu0
        %v1216 = vadd.f32 0.0, %v1215
        %v1217 = vpop.f32.mrb[0].mxu0
        %v1218 = vadd.f32 0.0, %v1217
        %v1219 = vpop.f32.mrb[0].mxu0
        %v1220 = vadd.f32 0.0, %v1219
        %1221 = vdwg.mxu0
        %1222 = vmatprep.subr.bf16.mxu0 %v920
        %1223 = vmatpush1.bf16.msra.mxu0 %v919
        %1224 = vmatprep.subr.bf16.mxu0 %v926
        %1225 = vmatpush1.bf16.msra.mxu0 %v925
        %1226 = vmatprep.subr.bf16.mxu0 %v932
        %1227 = vmatpush1.bf16.msra.mxu0 %v931
        %1228 = vmatprep.subr.bf16.mxu0 %v938
        %1229 = vmatpush1.bf16.msra.mxu0 %v937
        %1230 = vmatprep.subr.bf16.mxu0 %v944
        %1231 = vmatpush1.bf16.msra.mxu0 %v943
        %1232 = vmatprep.subr.bf16.mxu0 %v950
        %1233 = vmatpush1.bf16.msra.mxu0 %v949
        %1234 = vmatprep.subr.bf16.mxu0 %v956
        %1235 = vmatpush1.bf16.msra.mxu0 %v955
        %1236 = vmatprep.subr.bf16.mxu0 %v962
        %1237 = vmatpush1.bf16.msra.mxu0 %v961
        %1238 = vmatprep.subr.bf16.mxu0 %v968
        %1239 = vmatpush1.bf16.msra.mxu0 %v967
        %1240 = vmatprep.subr.bf16.mxu0 %v974
        %1241 = vmatpush1.bf16.msra.mxu0 %v973
        %1242 = vmatprep.subr.bf16.mxu0 %v980
        %1243 = vmatpush1.bf16.msra.mxu0 %v979
        %1244 = vmatprep.subr.bf16.mxu0 %v986
        %1245 = vmatpush1.bf16.msra.mxu0 %v985
        %1246 = vmatprep.subr.bf16.mxu0 %v992
        %1247 = vmatpush1.bf16.msra.mxu0 %v991
        %1248 = vmatprep.subr.bf16.mxu0 %v998
        %1249 = vmatpush1.bf16.msra.mxu0 %v997
        %1250 = vmatprep.subr.bf16.mxu0 %v1004
        %1251 = vmatpush1.bf16.msra.mxu0 %v1003
        %1252 = vmatprep.subr.bf16.mxu0 %v1010
        %1253 = vmatpush1.bf16.msra.mxu0 %v1009
        %1254 = vmatprep.mubr.bf16.mxu0 %v598
        %1255 = vmatmul.mubr.bf16.gmra.mrb[0].mxu0 %v597
        %v1256 = vpop.f32.mrb[0].mxu0
        %v1257 = vadd.f32 0.0, %v1256
        %v1258 = vpop.f32.mrb[0].mxu0
        %v1259 = vadd.f32 0.0, %v1258
        %v1260 = vpop.f32.mrb[0].mxu0
        %v1261 = vadd.f32 0.0, %v1260
        %v1262 = vpop.f32.mrb[0].mxu0
        %v1263 = vadd.f32 0.0, %v1262
        %1264 = vmatprep.mubr.bf16.mxu0 %v600
        %1265 = vmatmul.mubr.bf16.gmra.mrb[0].mxu0 %v599
        %v1266 = vpop.f32.mrb[0].mxu0
        %v1267 = vadd.f32 0.0, %v1266
        %v1268 = vpop.f32.mrb[0].mxu0
        %v1269 = vadd.f32 0.0, %v1268
        %v1270 = vpop.f32.mrb[0].mxu0
        %v1271 = vadd.f32 0.0, %v1270
        %v1272 = vpop.f32.mrb[0].mxu0
        %v1273 = vadd.f32 0.0, %v1272
        %1274 = vmatprep.mubr.bf16.mxu0 %v602
        %1275 = vmatmul.mubr.bf16.gmra.mrb[0].mxu0 %v601
        %v1276 = vpop.f32.mrb[0].mxu0
        %v1277 = vadd.f32 0.0, %v1276
        %v1278 = vpop.f32.mrb[0].mxu0
        %v1279 = vadd.f32 0.0, %v1278
        %v1280 = vpop.f32.mrb[0].mxu0
        %v1281 = vadd.f32 0.0, %v1280
        %v1282 = vpop.f32.mrb[0].mxu0
        %v1283 = vadd.f32 0.0, %v1282
        %1284 = vmatprep.mubr.bf16.mxu0 %v604
        %1285 = vmatmul.mubr.bf16.gmra.mrb[0].mxu0 %v603
        %v1286 = vpop.f32.mrb[0].mxu0
        %v1287 = vadd.f32 0.0, %v1286
        %v1288 = vpop.f32.mrb[0].mxu0
        %v1289 = vadd.f32 0.0, %v1288
        %v1290 = vpop.f32.mrb[0].mxu0
        %v1291 = vadd.f32 0.0, %v1290
        %v1292 = vpop.f32.mrb[0].mxu0
        %v1293 = vadd.f32 0.0, %v1292
        %1294 = vmatprep.mubr.bf16.mxu0 %v606
        %1295 = vmatmul.mubr.bf16.gmra.mrb[0].mxu0 %v605
        %v1296 = vpop.f32.mrb[0].mxu0
        %v1297 = vadd.f32 0.0, %v1296
        %v1298 = vpop.f32.mrb[0].mxu0
        %v1299 = vadd.f32 0.0, %v1298
        %v1300 = vpop.f32.mrb[0].mxu0
        %v1301 = vadd.f32 0.0, %v1300
        %v1302 = vpop.f32.mrb[0].mxu0
        %v1303 = vadd.f32 0.0, %v1302
        %1304 = vmatprep.mubr.bf16.mxu0 %v608
        %1305 = vmatmul.mubr.bf16.gmra.mrb[0].mxu0 %v607
        %v1306 = vpop.f32.mrb[0].mxu0
        %v1307 = vadd.f32 0.0, %v1306
        %v1308 = vpop.f32.mrb[0].mxu0
        %v1309 = vadd.f32 0.0, %v1308
        %v1310 = vpop.f32.mrb[0].mxu0
        %v1311 = vadd.f32 0.0, %v1310
        %v1312 = vpop.f32.mrb[0].mxu0
        %v1313 = vadd.f32 0.0, %v1312
        %1314 = vmatprep.mubr.bf16.mxu0 %v610
        %1315 = vmatmul.mubr.bf16.gmra.mrb[0].mxu0 %v609
        %v1316 = vpop.f32.mrb[0].mxu0
        %v1317 = vadd.f32 0.0, %v1316
        %v1318 = vpop.f32.mrb[0].mxu0
        %v1319 = vadd.f32 0.0, %v1318
        %v1320 = vpop.f32.mrb[0].mxu0
        %v1321 = vadd.f32 0.0, %v1320
        %v1322 = vpop.f32.mrb[0].mxu0
        %v1323 = vadd.f32 0.0, %v1322
        %1324 = vmatprep.mubr.bf16.mxu0 %v612
        %1325 = vmatmul.mubr.bf16.gmra.mrb[0].mxu0 %v611
        %v1326 = vpop.f32.mrb[0].mxu0
        %v1327 = vadd.f32 0.0, %v1326
        %v1328 = vpop.f32.mrb[0].mxu0
        %v1329 = vadd.f32 0.0, %v1328
        %v1330 = vpop.f32.mrb[0].mxu0
        %v1331 = vadd.f32 0.0, %v1330
        %v1332 = vpop.f32.mrb[0].mxu0
        %v1333 = vadd.f32 0.0, %v1332
        %1334 = vdwg.mxu0
        %1335 = vmatprep.subr.bf16.mxu0 %v922
        %1336 = vmatpush1.bf16.msra.mxu0 %v921
        %1337 = vmatprep.subr.bf16.mxu0 %v928
        %1338 = vmatpush1.bf16.msra.mxu0 %v927
        %1339 = vmatprep.subr.bf16.mxu0 %v934
        %1340 = vmatpush1.bf16.msra.mxu0 %v933
        %1341 = vmatprep.subr.bf16.mxu0 %v940
        %1342 = vmatpush1.bf16.msra.mxu0 %v939
        %1343 = vmatprep.subr.bf16.mxu0 %v946
        %1344 = vmatpush1.bf16.msra.mxu0 %v945
        %1345 = vmatprep.subr.bf16.mxu0 %v952
        %1346 = vmatpush1.bf16.msra.mxu0 %v951
        %1347 = vmatprep.subr.bf16.mxu0 %v958
        %1348 = vmatpush1.bf16.msra.mxu0 %v957
        %1349 = vmatprep.subr.bf16.mxu0 %v964
        %1350 = vmatpush1.bf16.msra.mxu0 %v963
        %1351 = vmatprep.subr.bf16.mxu0 %v970
        %1352 = vmatpush1.bf16.msra.mxu0 %v969
        %1353 = vmatprep.subr.bf16.mxu0 %v976
        %1354 = vmatpush1.bf16.msra.mxu0 %v975
        %1355 = vmatprep.subr.bf16.mxu0 %v982
        %1356 = vmatpush1.bf16.msra.mxu0 %v981
        %1357 = vmatprep.subr.bf16.mxu0 %v988
        %1358 = vmatpush1.bf16.msra.mxu0 %v987
        %1359 = vmatprep.subr.bf16.mxu0 %v994
        %1360 = vmatpush1.bf16.msra.mxu0 %v993
        %1361 = vmatprep.subr.bf16.mxu0 %v1000
        %1362 = vmatpush1.bf16.msra.mxu0 %v999
        %1363 = vmatprep.subr.bf16.mxu0 %v1006
        %1364 = vmatpush1.bf16.msra.mxu0 %v1005
        %1365 = vmatprep.subr.bf16.mxu0 %v1012
        %1366 = vmatpush1.bf16.msra.mxu0 %v1011
        %1367 = vmatprep.mubr.bf16.mxu0 %v598
        %1368 = vmatmul.mubr.bf16.gmra.mrb[0].mxu0 %v597
        %v1369 = vpop.f32.mrb[0].mxu0
        %v1370 = vadd.f32 0.0, %v1369
        %v1371 = vpop.f32.mrb[0].mxu0
        %v1372 = vadd.f32 0.0, %v1371
        %v1373 = vpop.f32.mrb[0].mxu0
        %v1374 = vadd.f32 0.0, %v1373
        %v1375 = vpop.f32.mrb[0].mxu0
        %v1376 = vadd.f32 0.0, %v1375
        %1377 = vmatprep.mubr.bf16.mxu0 %v600
        %1378 = vmatmul.mubr.bf16.gmra.mrb[0].mxu0 %v599
        %v1379 = vpop.f32.mrb[0].mxu0
        %v1380 = vadd.f32 0.0, %v1379
        %v1381 = vpop.f32.mrb[0].mxu0
        %v1382 = vadd.f32 0.0, %v1381
        %v1383 = vpop.f32.mrb[0].mxu0
        %v1384 = vadd.f32 0.0, %v1383
        %v1385 = vpop.f32.mrb[0].mxu0
        %v1386 = vadd.f32 0.0, %v1385
        %1387 = vmatprep.mubr.bf16.mxu0 %v602
        %1388 = vmatmul.mubr.bf16.gmra.mrb[0].mxu0 %v601
        %v1389 = vpop.f32.mrb[0].mxu0
        %v1390 = vadd.f32 0.0, %v1389
        %v1391 = vpop.f32.mrb[0].mxu0
        %v1392 = vadd.f32 0.0, %v1391
        %v1393 = vpop.f32.mrb[0].mxu0
        %v1394 = vadd.f32 0.0, %v1393
        %v1395 = vpop.f32.mrb[0].mxu0
        %v1396 = vadd.f32 0.0, %v1395
        %1397 = vmatprep.mubr.bf16.mxu0 %v604
        %1398 = vmatmul.mubr.bf16.gmra.mrb[0].mxu0 %v603
        %v1399 = vpop.f32.mrb[0].mxu0
        %v1400 = vadd.f32 0.0, %v1399
        %v1401 = vpop.f32.mrb[0].mxu0
        %v1402 = vadd.f32 0.0, %v1401
        %v1403 = vpop.f32.mrb[0].mxu0
        %v1404 = vadd.f32 0.0, %v1403
        %v1405 = vpop.f32.mrb[0].mxu0
        %v1406 = vadd.f32 0.0, %v1405
        %1407 = vmatprep.mubr.bf16.mxu0 %v606
        %1408 = vmatmul.mubr.bf16.gmra.mrb[0].mxu0 %v605
        %v1409 = vpop.f32.mrb[0].mxu0
        %v1410 = vadd.f32 0.0, %v1409
        %v1411 = vpop.f32.mrb[0].mxu0
        %v1412 = vadd.f32 0.0, %v1411
        %v1413 = vpop.f32.mrb[0].mxu0
        %v1414 = vadd.f32 0.0, %v1413
        %v1415 = vpop.f32.mrb[0].mxu0
        %v1416 = vadd.f32 0.0, %v1415
        %1417 = vmatprep.mubr.bf16.mxu0 %v608
        %1418 = vmatmul.mubr.bf16.gmra.mrb[0].mxu0 %v607
        %v1419 = vpop.f32.mrb[0].mxu0
        %v1420 = vadd.f32 0.0, %v1419
        %v1421 = vpop.f32.mrb[0].mxu0
        %v1422 = vadd.f32 0.0, %v1421
        %v1423 = vpop.f32.mrb[0].mxu0
        %v1424 = vadd.f32 0.0, %v1423
        %v1425 = vpop.f32.mrb[0].mxu0
        %v1426 = vadd.f32 0.0, %v1425
        %1427 = vmatprep.mubr.bf16.mxu0 %v610
        %1428 = vmatmul.mubr.bf16.gmra.mrb[0].mxu0 %v609
        %v1429 = vpop.f32.mrb[0].mxu0
        %v1430 = vadd.f32 0.0, %v1429
        %v1431 = vpop.f32.mrb[0].mxu0
        %v1432 = vadd.f32 0.0, %v1431
        %v1433 = vpop.f32.mrb[0].mxu0
        %v1434 = vadd.f32 0.0, %v1433
        %v1435 = vpop.f32.mrb[0].mxu0
        %v1436 = vadd.f32 0.0, %v1435
        %1437 = vmatprep.mubr.bf16.mxu0 %v612
        %1438 = vmatmul.mubr.bf16.gmra.mrb[0].mxu0 %v611
        %v1439 = vpop.f32.mrb[0].mxu0
        %v1440 = vadd.f32 0.0, %v1439
        %v1441 = vpop.f32.mrb[0].mxu0
        %v1442 = vadd.f32 0.0, %v1441
        %v1443 = vpop.f32.mrb[0].mxu0
        %v1444 = vadd.f32 0.0, %v1443
        %v1445 = vpop.f32.mrb[0].mxu0
        %v1446 = vadd.f32 0.0, %v1445
        %1447 = vdwg.mxu0
        %v1448 = vld [vmem:[%s371] sm:$0xff]
        %v1449 = vld [vmem:[%s371 + $0x8] sm:$0xff]
        %v1450 = vld [vmem:[%s371 + $0x10] sm:$0xff]
        %v1451 = vld [vmem:[%s371 + $0x18] sm:$0xff]
        %v1452 = vld [vmem:[%s371 + $0x20] sm:$0xff]
        %v1453 = vld [vmem:[%s371 + $0x28] sm:$0xff]
        %v1454 = vld [vmem:[%s371 + $0x30] sm:$0xff]
        %v1455 = vld [vmem:[%s371 + $0x38] sm:$0xff]
        %v1456 = vld [vmem:[%s371 + $0x40] sm:$0xff]
        %v1457 = vld [vmem:[%s371 + $0x48] sm:$0xff]
        %v1458 = vld [vmem:[%s371 + $0x50] sm:$0xff]
        %v1459 = vld [vmem:[%s371 + $0x58] sm:$0xff]
        %v1460 = vld [vmem:[%s371 + $0x60] sm:$0xff]
        %v1461 = vld [vmem:[%s371 + $0x68] sm:$0xff]
        %v1462 = vld [vmem:[%s371 + $0x70] sm:$0xff]
        %v1463 = vld [vmem:[%s371 + $0x78] sm:$0xff]
        %v1464 = vld [vmem:[%s380] sm:$0xff]
        %v1465 = vld [vmem:[%s380 + $0x8] sm:$0xff]
        %v1466 = vld [vmem:[%s380 + $0x10] sm:$0xff]
        %v1467 = vld [vmem:[%s380 + $0x18] sm:$0xff]
        %v1468 = vld [vmem:[%s380 + $0x20] sm:$0xff]
        %v1469 = vld [vmem:[%s380 + $0x28] sm:$0xff]
        %v1470 = vld [vmem:[%s380 + $0x30] sm:$0xff]
        %v1471 = vld [vmem:[%s380 + $0x38] sm:$0xff]
        %v1472 = vld [vmem:[%s380 + $0x40] sm:$0xff]
        %v1473 = vld [vmem:[%s380 + $0x48] sm:$0xff]
        %v1474 = vld [vmem:[%s380 + $0x50] sm:$0xff]
        %v1475 = vld [vmem:[%s380 + $0x58] sm:$0xff]
        %v1476 = vld [vmem:[%s380 + $0x60] sm:$0xff]
        %v1477 = vld [vmem:[%s380 + $0x68] sm:$0xff]
        %v1478 = vld [vmem:[%s380 + $0x70] sm:$0xff]
        %v1479 = vld [vmem:[%s380 + $0x78] sm:$0xff]
        %v1480 = vmul.f32 %v1144, %v1448
        %v1481 = vmul.f32 %v1148, %v1449
        %v1482 = vmul.f32 %v1154, %v1450
        %v1483 = vmul.f32 %v1158, %v1451
        %v1484 = vmul.f32 %v1164, %v1452
        %v1485 = vmul.f32 %v1168, %v1453
        %v1486 = vmul.f32 %v1174, %v1454
        %v1487 = vmul.f32 %v1178, %v1455
        %v1488 = vmul.f32 %v1184, %v1456
        %v1489 = vmul.f32 %v1188, %v1457
        %v1490 = vmul.f32 %v1194, %v1458
        %v1491 = vmul.f32 %v1198, %v1459
        %v1492 = vmul.f32 %v1204, %v1460
        %v1493 = vmul.f32 %v1208, %v1461
        %v1494 = vmul.f32 %v1214, %v1462
        %v1495 = vmul.f32 %v1218, %v1463
        %v1496 = vsub.f32 0.0, %v1144
        %v1497 = vsub.f32 0.0, %v1148
        %v1498 = vsub.f32 0.0, %v1154
        %v1499 = vsub.f32 0.0, %v1158
        %v1500 = vsub.f32 0.0, %v1164
        %v1501 = vsub.f32 0.0, %v1168
        %v1502 = vsub.f32 0.0, %v1174
        %v1503 = vsub.f32 0.0, %v1178
        %v1504 = vsub.f32 0.0, %v1184
        %v1505 = vsub.f32 0.0, %v1188
        %v1506 = vsub.f32 0.0, %v1194
        %v1507 = vsub.f32 0.0, %v1198
        %v1508 = vsub.f32 0.0, %v1204
        %v1509 = vsub.f32 0.0, %v1208
        %v1510 = vsub.f32 0.0, %v1214
        %v1511 = vsub.f32 0.0, %v1218
        %1528 = vrot.lane.b32.xlu0 %v1496, 64
        %v1529 = vpop.permute.xlu0 %1528
        %1530 = vrot.lane.b32.xlu0 %v1497, 64
        %v1531 = vpop.permute.xlu0 %1530
        %1532 = vrot.lane.b32.xlu0 %v1498, 64
        %v1533 = vpop.permute.xlu0 %1532
        %1534 = vrot.lane.b32.xlu0 %v1499, 64
        %v1535 = vpop.permute.xlu0 %1534
        %1536 = vrot.lane.b32.xlu0 %v1500, 64
        %v1537 = vpop.permute.xlu0 %1536
        %1538 = vrot.lane.b32.xlu0 %v1501, 64
        %v1539 = vpop.permute.xlu0 %1538
        %1540 = vrot.lane.b32.xlu0 %v1502, 64
        %v1541 = vpop.permute.xlu0 %1540
        %1542 = vrot.lane.b32.xlu0 %v1503, 64
        %v1543 = vpop.permute.xlu0 %1542
        %1544 = vrot.lane.b32.xlu0 %v1504, 64
        %v1545 = vpop.permute.xlu0 %1544
        %1546 = vrot.lane.b32.xlu0 %v1505, 64
        %v1547 = vpop.permute.xlu0 %1546
        %1548 = vrot.lane.b32.xlu0 %v1506, 64
        %v1549 = vpop.permute.xlu0 %1548
        %1550 = vrot.lane.b32.xlu0 %v1507, 64
        %v1551 = vpop.permute.xlu0 %1550
        %1552 = vrot.lane.b32.xlu0 %v1508, 64
        %v1553 = vpop.permute.xlu0 %1552
        %1554 = vrot.lane.b32.xlu0 %v1509, 64
        %v1555 = vpop.permute.xlu0 %1554
        %1556 = vrot.lane.b32.xlu0 %v1510, 64
        %v1557 = vpop.permute.xlu0 %1556
        %1558 = vrot.lane.b32.xlu0 %v1511, 64
        %v1559 = vpop.permute.xlu0 %1558
        %1592 = vrot.lane.b32.xlu0 %v1144, 64
        %v1593 = vpop.permute.xlu0 %1592
        %1594 = vrot.lane.b32.xlu0 %v1148, 64
        %v1595 = vpop.permute.xlu0 %1594
        %1596 = vrot.lane.b32.xlu0 %v1154, 64
        %v1597 = vpop.permute.xlu0 %1596
        %1598 = vrot.lane.b32.xlu0 %v1158, 64
        %v1599 = vpop.permute.xlu0 %1598
        %1600 = vrot.lane.b32.xlu0 %v1164, 64
        %v1601 = vpop.permute.xlu0 %1600
        %1602 = vrot.lane.b32.xlu0 %v1168, 64
        %v1603 = vpop.permute.xlu0 %1602
        %1604 = vrot.lane.b32.xlu0 %v1174, 64
        %v1605 = vpop.permute.xlu0 %1604
        %1606 = vrot.lane.b32.xlu0 %v1178, 64
        %v1607 = vpop.permute.xlu0 %1606
        %1608 = vrot.lane.b32.xlu0 %v1184, 64
        %v1609 = vpop.permute.xlu0 %1608
        %1610 = vrot.lane.b32.xlu0 %v1188, 64
        %v1611 = vpop.permute.xlu0 %1610
        %1612 = vrot.lane.b32.xlu0 %v1194, 64
        %v1613 = vpop.permute.xlu0 %1612
        %1614 = vrot.lane.b32.xlu0 %v1198, 64
        %v1615 = vpop.permute.xlu0 %1614
        %1616 = vrot.lane.b32.xlu0 %v1204, 64
        %v1617 = vpop.permute.xlu0 %1616
        %1618 = vrot.lane.b32.xlu0 %v1208, 64
        %v1619 = vpop.permute.xlu0 %1618
        %1620 = vrot.lane.b32.xlu0 %v1214, 64
        %v1621 = vpop.permute.xlu0 %1620
        %1622 = vrot.lane.b32.xlu0 %v1218, 64
        %v1623 = vpop.permute.xlu0 %1622
        %vm1640 = vcmask 523264
        %v1641 = vsel %vm1640, %v1529, %v1593
        %v1642 = vsel %vm1640, %v1531, %v1595
        %v1643 = vsel %vm1640, %v1533, %v1597
        %v1644 = vsel %vm1640, %v1535, %v1599
        %v1645 = vsel %vm1640, %v1537, %v1601
        %v1646 = vsel %vm1640, %v1539, %v1603
        %v1647 = vsel %vm1640, %v1541, %v1605
        %v1648 = vsel %vm1640, %v1543, %v1607
        %v1649 = vsel %vm1640, %v1545, %v1609
        %v1650 = vsel %vm1640, %v1547, %v1611
        %v1651 = vsel %vm1640, %v1549, %v1613
        %v1652 = vsel %vm1640, %v1551, %v1615
        %v1653 = vsel %vm1640, %v1553, %v1617
        %v1654 = vsel %vm1640, %v1555, %v1619
        %v1655 = vsel %vm1640, %v1557, %v1621
        %v1656 = vsel %vm1640, %v1559, %v1623
        %v1657 = vmul.f32 %v1641, %v1464
        %v1658 = vmul.f32 %v1642, %v1465
        %v1659 = vmul.f32 %v1643, %v1466
        %v1660 = vmul.f32 %v1644, %v1467
        %v1661 = vmul.f32 %v1645, %v1468
        %v1662 = vmul.f32 %v1646, %v1469
        %v1663 = vmul.f32 %v1647, %v1470
        %v1664 = vmul.f32 %v1648, %v1471
        %v1665 = vmul.f32 %v1649, %v1472
        %v1666 = vmul.f32 %v1650, %v1473
        %v1667 = vmul.f32 %v1651, %v1474
        %v1668 = vmul.f32 %v1652, %v1475
        %v1669 = vmul.f32 %v1653, %v1476
        %v1670 = vmul.f32 %v1654, %v1477
        %v1671 = vmul.f32 %v1655, %v1478
        %v1672 = vmul.f32 %v1656, %v1479
        %v1673 = vadd.f32 %v1480, %v1657
        %v1674 = vadd.f32 %v1481, %v1658
        %v1675 = vadd.f32 %v1482, %v1659
        %v1676 = vadd.f32 %v1483, %v1660
        %v1677 = vadd.f32 %v1484, %v1661
        %v1678 = vadd.f32 %v1485, %v1662
        %v1679 = vadd.f32 %v1486, %v1663
        %v1680 = vadd.f32 %v1487, %v1664
        %v1681 = vadd.f32 %v1488, %v1665
        %v1682 = vadd.f32 %v1489, %v1666
        %v1683 = vadd.f32 %v1490, %v1667
        %v1684 = vadd.f32 %v1491, %v1668
        %v1685 = vadd.f32 %v1492, %v1669
        %v1686 = vadd.f32 %v1493, %v1670
        %v1687 = vadd.f32 %v1494, %v1671
        %v1688 = vadd.f32 %v1495, %v1672
        %v1689 = vmul.f32 %v1673, 0.088388346
        %v1690 = vmul.f32 %v1674, 0.088388346
        %v1691 = vmul.f32 %v1675, 0.088388346
        %v1692 = vmul.f32 %v1676, 0.088388346
        %v1693 = vmul.f32 %v1677, 0.088388346
        %v1694 = vmul.f32 %v1678, 0.088388346
        %v1695 = vmul.f32 %v1679, 0.088388346
        %v1696 = vmul.f32 %v1680, 0.088388346
        %v1697 = vmul.f32 %v1681, 0.088388346
        %v1698 = vmul.f32 %v1682, 0.088388346
        %v1699 = vmul.f32 %v1683, 0.088388346
        %v1700 = vmul.f32 %v1684, 0.088388346
        %v1701 = vmul.f32 %v1685, 0.088388346
        %v1702 = vmul.f32 %v1686, 0.088388346
        %v1703 = vmul.f32 %v1687, 0.088388346
        %v1704 = vmul.f32 %v1688, 0.088388346
        %v1705 = vmul.f32 %v1146, %v1448
        %v1706 = vmul.f32 %v1150, %v1449
        %v1707 = vmul.f32 %v1156, %v1450
        %v1708 = vmul.f32 %v1160, %v1451
        %v1709 = vmul.f32 %v1166, %v1452
        %v1710 = vmul.f32 %v1170, %v1453
        %v1711 = vmul.f32 %v1176, %v1454
        %v1712 = vmul.f32 %v1180, %v1455
        %v1713 = vmul.f32 %v1186, %v1456
        %v1714 = vmul.f32 %v1190, %v1457
        %v1715 = vmul.f32 %v1196, %v1458
        %v1716 = vmul.f32 %v1200, %v1459
        %v1717 = vmul.f32 %v1206, %v1460
        %v1718 = vmul.f32 %v1210, %v1461
        %v1719 = vmul.f32 %v1216, %v1462
        %v1720 = vmul.f32 %v1220, %v1463
        %v1721 = vsub.f32 0.0, %v1146
        %v1722 = vsub.f32 0.0, %v1150
        %v1723 = vsub.f32 0.0, %v1156
        %v1724 = vsub.f32 0.0, %v1160
        %v1725 = vsub.f32 0.0, %v1166
        %v1726 = vsub.f32 0.0, %v1170
        %v1727 = vsub.f32 0.0, %v1176
        %v1728 = vsub.f32 0.0, %v1180
        %v1729 = vsub.f32 0.0, %v1186
        %v1730 = vsub.f32 0.0, %v1190
        %v1731 = vsub.f32 0.0, %v1196
        %v1732 = vsub.f32 0.0, %v1200
        %v1733 = vsub.f32 0.0, %v1206
        %v1734 = vsub.f32 0.0, %v1210
        %v1735 = vsub.f32 0.0, %v1216
        %v1736 = vsub.f32 0.0, %v1220
        %1753 = vrot.lane.b32.xlu0 %v1721, 64
        %v1754 = vpop.permute.xlu0 %1753
        %1755 = vrot.lane.b32.xlu0 %v1722, 64
        %v1756 = vpop.permute.xlu0 %1755
        %1757 = vrot.lane.b32.xlu0 %v1723, 64
        %v1758 = vpop.permute.xlu0 %1757
        %1759 = vrot.lane.b32.xlu0 %v1724, 64
        %v1760 = vpop.permute.xlu0 %1759
        %1761 = vrot.lane.b32.xlu0 %v1725, 64
        %v1762 = vpop.permute.xlu0 %1761
        %1763 = vrot.lane.b32.xlu0 %v1726, 64
        %v1764 = vpop.permute.xlu0 %1763
        %1765 = vrot.lane.b32.xlu0 %v1727, 64
        %v1766 = vpop.permute.xlu0 %1765
        %1767 = vrot.lane.b32.xlu0 %v1728, 64
        %v1768 = vpop.permute.xlu0 %1767
        %1769 = vrot.lane.b32.xlu0 %v1729, 64
        %v1770 = vpop.permute.xlu0 %1769
        %1771 = vrot.lane.b32.xlu0 %v1730, 64
        %v1772 = vpop.permute.xlu0 %1771
        %1773 = vrot.lane.b32.xlu0 %v1731, 64
        %v1774 = vpop.permute.xlu0 %1773
        %1775 = vrot.lane.b32.xlu0 %v1732, 64
        %v1776 = vpop.permute.xlu0 %1775
        %1777 = vrot.lane.b32.xlu0 %v1733, 64
        %v1778 = vpop.permute.xlu0 %1777
        %1779 = vrot.lane.b32.xlu0 %v1734, 64
        %v1780 = vpop.permute.xlu0 %1779
        %1781 = vrot.lane.b32.xlu0 %v1735, 64
        %v1782 = vpop.permute.xlu0 %1781
        %1783 = vrot.lane.b32.xlu0 %v1736, 64
        %v1784 = vpop.permute.xlu0 %1783
        %1817 = vrot.lane.b32.xlu0 %v1146, 64
        %v1818 = vpop.permute.xlu0 %1817
        %1819 = vrot.lane.b32.xlu0 %v1150, 64
        %v1820 = vpop.permute.xlu0 %1819
        %1821 = vrot.lane.b32.xlu0 %v1156, 64
        %v1822 = vpop.permute.xlu0 %1821
        %1823 = vrot.lane.b32.xlu0 %v1160, 64
        %v1824 = vpop.permute.xlu0 %1823
        %1825 = vrot.lane.b32.xlu0 %v1166, 64
        %v1826 = vpop.permute.xlu0 %1825
        %1827 = vrot.lane.b32.xlu0 %v1170, 64
        %v1828 = vpop.permute.xlu0 %1827
        %1829 = vrot.lane.b32.xlu0 %v1176, 64
        %v1830 = vpop.permute.xlu0 %1829
        %1831 = vrot.lane.b32.xlu0 %v1180, 64
        %v1832 = vpop.permute.xlu0 %1831
        %1833 = vrot.lane.b32.xlu0 %v1186, 64
        %v1834 = vpop.permute.xlu0 %1833
        %1835 = vrot.lane.b32.xlu0 %v1190, 64
        %v1836 = vpop.permute.xlu0 %1835
        %1837 = vrot.lane.b32.xlu0 %v1196, 64
        %v1838 = vpop.permute.xlu0 %1837
        %1839 = vrot.lane.b32.xlu0 %v1200, 64
        %v1840 = vpop.permute.xlu0 %1839
        %1841 = vrot.lane.b32.xlu0 %v1206, 64
        %v1842 = vpop.permute.xlu0 %1841
        %1843 = vrot.lane.b32.xlu0 %v1210, 64
        %v1844 = vpop.permute.xlu0 %1843
        %1845 = vrot.lane.b32.xlu0 %v1216, 64
        %v1846 = vpop.permute.xlu0 %1845
        %1847 = vrot.lane.b32.xlu0 %v1220, 64
        %v1848 = vpop.permute.xlu0 %1847
        %v1865 = vsel %vm1640, %v1754, %v1818
        %v1866 = vsel %vm1640, %v1756, %v1820
        %v1867 = vsel %vm1640, %v1758, %v1822
        %v1868 = vsel %vm1640, %v1760, %v1824
        %v1869 = vsel %vm1640, %v1762, %v1826
        %v1870 = vsel %vm1640, %v1764, %v1828
        %v1871 = vsel %vm1640, %v1766, %v1830
        %v1872 = vsel %vm1640, %v1768, %v1832
        %v1873 = vsel %vm1640, %v1770, %v1834
        %v1874 = vsel %vm1640, %v1772, %v1836
        %v1875 = vsel %vm1640, %v1774, %v1838
        %v1876 = vsel %vm1640, %v1776, %v1840
        %v1877 = vsel %vm1640, %v1778, %v1842
        %v1878 = vsel %vm1640, %v1780, %v1844
        %v1879 = vsel %vm1640, %v1782, %v1846
        %v1880 = vsel %vm1640, %v1784, %v1848
        %v1881 = vmul.f32 %v1865, %v1464
        %v1882 = vmul.f32 %v1866, %v1465
        %v1883 = vmul.f32 %v1867, %v1466
        %v1884 = vmul.f32 %v1868, %v1467
        %v1885 = vmul.f32 %v1869, %v1468
        %v1886 = vmul.f32 %v1870, %v1469
        %v1887 = vmul.f32 %v1871, %v1470
        %v1888 = vmul.f32 %v1872, %v1471
        %v1889 = vmul.f32 %v1873, %v1472
        %v1890 = vmul.f32 %v1874, %v1473
        %v1891 = vmul.f32 %v1875, %v1474
        %v1892 = vmul.f32 %v1876, %v1475
        %v1893 = vmul.f32 %v1877, %v1476
        %v1894 = vmul.f32 %v1878, %v1477
        %v1895 = vmul.f32 %v1879, %v1478
        %v1896 = vmul.f32 %v1880, %v1479
        %v1897 = vadd.f32 %v1705, %v1881
        %v1898 = vadd.f32 %v1706, %v1882
        %v1899 = vadd.f32 %v1707, %v1883
        %v1900 = vadd.f32 %v1708, %v1884
        %v1901 = vadd.f32 %v1709, %v1885
        %v1902 = vadd.f32 %v1710, %v1886
        %v1903 = vadd.f32 %v1711, %v1887
        %v1904 = vadd.f32 %v1712, %v1888
        %v1905 = vadd.f32 %v1713, %v1889
        %v1906 = vadd.f32 %v1714, %v1890
        %v1907 = vadd.f32 %v1715, %v1891
        %v1908 = vadd.f32 %v1716, %v1892
        %v1909 = vadd.f32 %v1717, %v1893
        %v1910 = vadd.f32 %v1718, %v1894
        %v1911 = vadd.f32 %v1719, %v1895
        %v1912 = vadd.f32 %v1720, %v1896
        %v1913 = vpack.c.bf16 %v1690, %v1689
        %v1914 = vpack.c.bf16 %v1692, %v1691
        %v1915 = vpack.c.bf16 %v1694, %v1693
        %v1916 = vpack.c.bf16 %v1696, %v1695
        %v1917 = vpack.c.bf16 %v1698, %v1697
        %v1918 = vpack.c.bf16 %v1700, %v1699
        %v1919 = vpack.c.bf16 %v1702, %v1701
        %v1920 = vpack.c.bf16 %v1704, %v1703
        %v1929 = vunpack.c.l.b16 %v1913
        %v1930 = vunpack.c.h.b16 %v1913
        %v1931 = vunpack.c.l.b16 %v1914
        %v1932 = vunpack.c.h.b16 %v1914
        %v1933 = vunpack.c.l.b16 %v1915
        %v1934 = vunpack.c.h.b16 %v1915
        %v1935 = vunpack.c.l.b16 %v1916
        %v1936 = vunpack.c.h.b16 %v1916
        %v1937 = vunpack.c.l.b16 %v1917
        %v1938 = vunpack.c.h.b16 %v1917
        %v1939 = vunpack.c.l.b16 %v1918
        %v1940 = vunpack.c.h.b16 %v1918
        %v1941 = vunpack.c.l.b16 %v1919
        %v1942 = vunpack.c.h.b16 %v1919
        %v1943 = vunpack.c.l.b16 %v1920
        %v1944 = vunpack.c.h.b16 %v1920
        %v1945 = vpack.c.b16 %v1929, %v1929
        %v1946 = vpack.c.b16 %v1930, %v1930
        %v1947 = vpack.c.b16 %v1931, %v1931
        %v1948 = vpack.c.b16 %v1932, %v1932
        %v1949 = vpack.c.b16 %v1933, %v1933
        %v1950 = vpack.c.b16 %v1934, %v1934
        %v1951 = vpack.c.b16 %v1935, %v1935
        %v1952 = vpack.c.b16 %v1936, %v1936
        %v1953 = vpack.c.b16 %v1937, %v1937
        %v1954 = vpack.c.b16 %v1938, %v1938
        %v1955 = vpack.c.b16 %v1939, %v1939
        %v1956 = vpack.c.b16 %v1940, %v1940
        %v1957 = vpack.c.b16 %v1941, %v1941
        %v1958 = vpack.c.b16 %v1942, %v1942
        %v1959 = vpack.c.b16 %v1943, %v1943
        %v1960 = vpack.c.b16 %v1944, %v1944
        %1977 = vst [vmem:[%s414] sm:$0xf] %v1945
        %1978 = vst [vmem:[%s414 + $0x4] sm:$0xf] %v1946
        %1979 = vst [vmem:[%s414 + $0x8] sm:$0xf] %v1947
        %1980 = vst [vmem:[%s414 + $0xc] sm:$0xf] %v1948
        %1981 = vst [vmem:[%s414 + $0x10] sm:$0xf] %v1949
        %1982 = vst [vmem:[%s414 + $0x14] sm:$0xf] %v1950
        %1983 = vst [vmem:[%s414 + $0x18] sm:$0xf] %v1951
        %1984 = vst [vmem:[%s414 + $0x1c] sm:$0xf] %v1952
        %1985 = vst [vmem:[%s414 + $0x20] sm:$0xf] %v1953
        %1986 = vst [vmem:[%s414 + $0x24] sm:$0xf] %v1954
        %1987 = vst [vmem:[%s414 + $0x28] sm:$0xf] %v1955
        %1988 = vst [vmem:[%s414 + $0x2c] sm:$0xf] %v1956
        %1989 = vst [vmem:[%s414 + $0x30] sm:$0xf] %v1957
        %1990 = vst [vmem:[%s414 + $0x34] sm:$0xf] %v1958
        %1991 = vst [vmem:[%s414 + $0x38] sm:$0xf] %v1959
        %1992 = vst [vmem:[%s414 + $0x3c] sm:$0xf] %v1960
        %1993 = vxpose.xlu0.b32.start [1/16] %v1897, 128
        %1994 = vxpose.xlu0.b32.cont [2/16] %v1898, 128
        %1995 = vxpose.xlu0.b32.cont [3/16] %v1899, 128
        %1996 = vxpose.xlu0.b32.cont [4/16] %v1900, 128
        %1997 = vxpose.xlu0.b32.cont [5/16] %v1901, 128
        %1998 = vxpose.xlu0.b32.cont [6/16] %v1902, 128
        %1999 = vxpose.xlu0.b32.cont [7/16] %v1903, 128
        %2000 = vxpose.xlu0.b32.cont [8/16] %v1904, 128
        %2001 = vxpose.xlu0.b32.cont [9/16] %v1905, 128
        %2002 = vxpose.xlu0.b32.cont [10/16] %v1906, 128
        %2003 = vxpose.xlu0.b32.cont [11/16] %v1907, 128
        %2004 = vxpose.xlu0.b32.cont [12/16] %v1908, 128
        %2005 = vxpose.xlu0.b32.cont [13/16] %v1909, 128
        %2006 = vxpose.xlu0.b32.cont [14/16] %v1910, 128
        %2007 = vxpose.xlu0.b32.cont [15/16] %v1911, 128
        %2008 = vxpose.xlu0.b32.end [16/16] %v1912, 128
        %v2009 = vpop.trf.xlu0
        %v2010 = vpop.trf.xlu0
        %v2011 = vpop.trf.xlu0
        %v2012 = vpop.trf.xlu0
        %v2013 = vpop.trf.xlu0
        %v2014 = vpop.trf.xlu0
        %v2015 = vpop.trf.xlu0
        %v2016 = vpop.trf.xlu0
        %v2017 = vpop.trf.xlu0
        %v2018 = vpop.trf.xlu0
        %v2019 = vpop.trf.xlu0
        %v2020 = vpop.trf.xlu0
        %v2021 = vpop.trf.xlu0
        %v2022 = vpop.trf.xlu0
        %v2023 = vpop.trf.xlu0
        %v2024 = vpop.trf.xlu0
        %v2025 = vpack.c.bf16 %v2010, %v2009
        %v2026 = vpack.c.bf16 %v2012, %v2011
        %v2027 = vpack.c.bf16 %v2014, %v2013
        %v2028 = vpack.c.bf16 %v2016, %v2015
        %v2029 = vpack.c.bf16 %v2018, %v2017
        %v2030 = vpack.c.bf16 %v2020, %v2019
        %v2031 = vpack.c.bf16 %v2022, %v2021
        %v2032 = vpack.c.bf16 %v2024, %v2023
        %v2041 = vunpack.c.l.b16 %v2025
        %v2042 = vunpack.c.h.b16 %v2025
        %v2043 = vunpack.c.l.b16 %v2026
        %v2044 = vunpack.c.h.b16 %v2026
        %v2045 = vunpack.c.l.b16 %v2027
        %v2046 = vunpack.c.h.b16 %v2027
        %v2047 = vunpack.c.l.b16 %v2028
        %v2048 = vunpack.c.h.b16 %v2028
        %v2049 = vunpack.c.l.b16 %v2029
        %v2050 = vunpack.c.h.b16 %v2029
        %v2051 = vunpack.c.l.b16 %v2030
        %v2052 = vunpack.c.h.b16 %v2030
        %v2053 = vunpack.c.l.b16 %v2031
        %v2054 = vunpack.c.h.b16 %v2031
        %v2055 = vunpack.c.l.b16 %v2032
        %v2056 = vunpack.c.h.b16 %v2032
        %v2057 = vpack.c.b16 %v2041, %v2041
        %v2058 = vpack.c.b16 %v2042, %v2042
        %v2059 = vpack.c.b16 %v2043, %v2043
        %v2060 = vpack.c.b16 %v2044, %v2044
        %v2061 = vpack.c.b16 %v2045, %v2045
        %v2062 = vpack.c.b16 %v2046, %v2046
        %v2063 = vpack.c.b16 %v2047, %v2047
        %v2064 = vpack.c.b16 %v2048, %v2048
        %v2065 = vpack.c.b16 %v2049, %v2049
        %v2066 = vpack.c.b16 %v2050, %v2050
        %v2067 = vpack.c.b16 %v2051, %v2051
        %v2068 = vpack.c.b16 %v2052, %v2052
        %v2069 = vpack.c.b16 %v2053, %v2053
        %v2070 = vpack.c.b16 %v2054, %v2054
        %v2071 = vpack.c.b16 %v2055, %v2055
        %v2072 = vpack.c.b16 %v2056, %v2056
        %2089 = vst [vmem:[%s421] sm:$0xf] %v2057
        %2090 = vst [vmem:[%s421 + $0x4] sm:$0xf] %v2058
        %2091 = vst [vmem:[%s421 + $0x8] sm:$0xf] %v2059
        %2092 = vst [vmem:[%s421 + $0xc] sm:$0xf] %v2060
        %2093 = vst [vmem:[%s421 + $0x10] sm:$0xf] %v2061
        %2094 = vst [vmem:[%s421 + $0x14] sm:$0xf] %v2062
        %2095 = vst [vmem:[%s421 + $0x18] sm:$0xf] %v2063
        %2096 = vst [vmem:[%s421 + $0x1c] sm:$0xf] %v2064
        %2097 = vst [vmem:[%s421 + $0x20] sm:$0xf] %v2065
        %2098 = vst [vmem:[%s421 + $0x24] sm:$0xf] %v2066
        %2099 = vst [vmem:[%s421 + $0x28] sm:$0xf] %v2067
        %2100 = vst [vmem:[%s421 + $0x2c] sm:$0xf] %v2068
        %2101 = vst [vmem:[%s421 + $0x30] sm:$0xf] %v2069
        %2102 = vst [vmem:[%s421 + $0x34] sm:$0xf] %v2070
        %2103 = vst [vmem:[%s421 + $0x38] sm:$0xf] %v2071
        %2104 = vst [vmem:[%s421 + $0x3c] sm:$0xf] %v2072
        %v2105 = vpack.c.bf16 %v1261, %v1257
        %v2106 = vpack.c.bf16 %v1271, %v1267
        %v2107 = vpack.c.bf16 %v1281, %v1277
        %v2108 = vpack.c.bf16 %v1291, %v1287
        %v2109 = vpack.c.bf16 %v1301, %v1297
        %v2110 = vpack.c.bf16 %v1311, %v1307
        %v2111 = vpack.c.bf16 %v1321, %v1317
        %v2112 = vpack.c.bf16 %v1331, %v1327
        %v2121 = vunpack.c.l.b16 %v2105
        %v2122 = vunpack.c.h.b16 %v2105
        %v2123 = vunpack.c.l.b16 %v2106
        %v2124 = vunpack.c.h.b16 %v2106
        %v2125 = vunpack.c.l.b16 %v2107
        %v2126 = vunpack.c.h.b16 %v2107
        %v2127 = vunpack.c.l.b16 %v2108
        %v2128 = vunpack.c.h.b16 %v2108
        %v2129 = vunpack.c.l.b16 %v2109
        %v2130 = vunpack.c.h.b16 %v2109
        %v2131 = vunpack.c.l.b16 %v2110
        %v2132 = vunpack.c.h.b16 %v2110
        %v2133 = vunpack.c.l.b16 %v2111
        %v2134 = vunpack.c.h.b16 %v2111
        %v2135 = vunpack.c.l.b16 %v2112
        %v2136 = vunpack.c.h.b16 %v2112
        %v2137 = vpack.c.b16 %v2121, %v2121
        %v2138 = vpack.c.b16 %v2122, %v2122
        %v2139 = vpack.c.b16 %v2123, %v2123
        %v2140 = vpack.c.b16 %v2124, %v2124
        %v2141 = vpack.c.b16 %v2125, %v2125
        %v2142 = vpack.c.b16 %v2126, %v2126
        %v2143 = vpack.c.b16 %v2127, %v2127
        %v2144 = vpack.c.b16 %v2128, %v2128
        %v2145 = vpack.c.b16 %v2129, %v2129
        %v2146 = vpack.c.b16 %v2130, %v2130
        %v2147 = vpack.c.b16 %v2131, %v2131
        %v2148 = vpack.c.b16 %v2132, %v2132
        %v2149 = vpack.c.b16 %v2133, %v2133
        %v2150 = vpack.c.b16 %v2134, %v2134
        %v2151 = vpack.c.b16 %v2135, %v2135
        %v2152 = vpack.c.b16 %v2136, %v2136
        %2169 = vst [vmem:[%s428] sm:$0xf] %v2137
        %2170 = vst [vmem:[%s428 + $0x4] sm:$0xf] %v2138
        %2171 = vst [vmem:[%s428 + $0x8] sm:$0xf] %v2139
        %2172 = vst [vmem:[%s428 + $0xc] sm:$0xf] %v2140
        %2173 = vst [vmem:[%s428 + $0x10] sm:$0xf] %v2141
        %2174 = vst [vmem:[%s428 + $0x14] sm:$0xf] %v2142
        %2175 = vst [vmem:[%s428 + $0x18] sm:$0xf] %v2143
        %2176 = vst [vmem:[%s428 + $0x1c] sm:$0xf] %v2144
        %2177 = vst [vmem:[%s428 + $0x20] sm:$0xf] %v2145
        %2178 = vst [vmem:[%s428 + $0x24] sm:$0xf] %v2146
        %2179 = vst [vmem:[%s428 + $0x28] sm:$0xf] %v2147
        %2180 = vst [vmem:[%s428 + $0x2c] sm:$0xf] %v2148
        %2181 = vst [vmem:[%s428 + $0x30] sm:$0xf] %v2149
        %2182 = vst [vmem:[%s428 + $0x34] sm:$0xf] %v2150
        %2183 = vst [vmem:[%s428 + $0x38] sm:$0xf] %v2151
        %2184 = vst [vmem:[%s428 + $0x3c] sm:$0xf] %v2152
        %v2185 = vmul.f32 %v1259, %v1448
        %v2186 = vmul.f32 %v1263, %v1449
        %v2187 = vmul.f32 %v1269, %v1450
        %v2188 = vmul.f32 %v1273, %v1451
        %v2189 = vmul.f32 %v1279, %v1452
        %v2190 = vmul.f32 %v1283, %v1453
        %v2191 = vmul.f32 %v1289, %v1454
        %v2192 = vmul.f32 %v1293, %v1455
        %v2193 = vmul.f32 %v1299, %v1456
        %v2194 = vmul.f32 %v1303, %v1457
        %v2195 = vmul.f32 %v1309, %v1458
        %v2196 = vmul.f32 %v1313, %v1459
        %v2197 = vmul.f32 %v1319, %v1460
        %v2198 = vmul.f32 %v1323, %v1461
        %v2199 = vmul.f32 %v1329, %v1462
        %v2200 = vmul.f32 %v1333, %v1463
        %v2201 = vsub.f32 0.0, %v1259
        %v2202 = vsub.f32 0.0, %v1263
        %v2203 = vsub.f32 0.0, %v1269
        %v2204 = vsub.f32 0.0, %v1273
        %v2205 = vsub.f32 0.0, %v1279
        %v2206 = vsub.f32 0.0, %v1283
        %v2207 = vsub.f32 0.0, %v1289
        %v2208 = vsub.f32 0.0, %v1293
        %v2209 = vsub.f32 0.0, %v1299
        %v2210 = vsub.f32 0.0, %v1303
        %v2211 = vsub.f32 0.0, %v1309
        %v2212 = vsub.f32 0.0, %v1313
        %v2213 = vsub.f32 0.0, %v1319
        %v2214 = vsub.f32 0.0, %v1323
        %v2215 = vsub.f32 0.0, %v1329
        %v2216 = vsub.f32 0.0, %v1333
        %2233 = vrot.lane.b32.xlu0 %v2201, 64
        %v2234 = vpop.permute.xlu0 %2233
        %2235 = vrot.lane.b32.xlu0 %v2202, 64
        %v2236 = vpop.permute.xlu0 %2235
        %2237 = vrot.lane.b32.xlu0 %v2203, 64
        %v2238 = vpop.permute.xlu0 %2237
        %2239 = vrot.lane.b32.xlu0 %v2204, 64
        %v2240 = vpop.permute.xlu0 %2239
        %2241 = vrot.lane.b32.xlu0 %v2205, 64
        %v2242 = vpop.permute.xlu0 %2241
        %2243 = vrot.lane.b32.xlu0 %v2206, 64
        %v2244 = vpop.permute.xlu0 %2243
        %2245 = vrot.lane.b32.xlu0 %v2207, 64
        %v2246 = vpop.permute.xlu0 %2245
        %2247 = vrot.lane.b32.xlu0 %v2208, 64
        %v2248 = vpop.permute.xlu0 %2247
        %2249 = vrot.lane.b32.xlu0 %v2209, 64
        %v2250 = vpop.permute.xlu0 %2249
        %2251 = vrot.lane.b32.xlu0 %v2210, 64
        %v2252 = vpop.permute.xlu0 %2251
        %2253 = vrot.lane.b32.xlu0 %v2211, 64
        %v2254 = vpop.permute.xlu0 %2253
        %2255 = vrot.lane.b32.xlu0 %v2212, 64
        %v2256 = vpop.permute.xlu0 %2255
        %2257 = vrot.lane.b32.xlu0 %v2213, 64
        %v2258 = vpop.permute.xlu0 %2257
        %2259 = vrot.lane.b32.xlu0 %v2214, 64
        %v2260 = vpop.permute.xlu0 %2259
        %2261 = vrot.lane.b32.xlu0 %v2215, 64
        %v2262 = vpop.permute.xlu0 %2261
        %2263 = vrot.lane.b32.xlu0 %v2216, 64
        %v2264 = vpop.permute.xlu0 %2263
        %2297 = vrot.lane.b32.xlu0 %v1259, 64
        %v2298 = vpop.permute.xlu0 %2297
        %2299 = vrot.lane.b32.xlu0 %v1263, 64
        %v2300 = vpop.permute.xlu0 %2299
        %2301 = vrot.lane.b32.xlu0 %v1269, 64
        %v2302 = vpop.permute.xlu0 %2301
        %2303 = vrot.lane.b32.xlu0 %v1273, 64
        %v2304 = vpop.permute.xlu0 %2303
        %2305 = vrot.lane.b32.xlu0 %v1279, 64
        %v2306 = vpop.permute.xlu0 %2305
        %2307 = vrot.lane.b32.xlu0 %v1283, 64
        %v2308 = vpop.permute.xlu0 %2307
        %2309 = vrot.lane.b32.xlu0 %v1289, 64
        %v2310 = vpop.permute.xlu0 %2309
        %2311 = vrot.lane.b32.xlu0 %v1293, 64
        %v2312 = vpop.permute.xlu0 %2311
        %2313 = vrot.lane.b32.xlu0 %v1299, 64
        %v2314 = vpop.permute.xlu0 %2313
        %2315 = vrot.lane.b32.xlu0 %v1303, 64
        %v2316 = vpop.permute.xlu0 %2315
        %2317 = vrot.lane.b32.xlu0 %v1309, 64
        %v2318 = vpop.permute.xlu0 %2317
        %2319 = vrot.lane.b32.xlu0 %v1313, 64
        %v2320 = vpop.permute.xlu0 %2319
        %2321 = vrot.lane.b32.xlu0 %v1319, 64
        %v2322 = vpop.permute.xlu0 %2321
        %2323 = vrot.lane.b32.xlu0 %v1323, 64
        %v2324 = vpop.permute.xlu0 %2323
        %2325 = vrot.lane.b32.xlu0 %v1329, 64
        %v2326 = vpop.permute.xlu0 %2325
        %2327 = vrot.lane.b32.xlu0 %v1333, 64
        %v2328 = vpop.permute.xlu0 %2327
        %v2345 = vsel %vm1640, %v2234, %v2298
        %v2346 = vsel %vm1640, %v2236, %v2300
        %v2347 = vsel %vm1640, %v2238, %v2302
        %v2348 = vsel %vm1640, %v2240, %v2304
        %v2349 = vsel %vm1640, %v2242, %v2306
        %v2350 = vsel %vm1640, %v2244, %v2308
        %v2351 = vsel %vm1640, %v2246, %v2310
        %v2352 = vsel %vm1640, %v2248, %v2312
        %v2353 = vsel %vm1640, %v2250, %v2314
        %v2354 = vsel %vm1640, %v2252, %v2316
        %v2355 = vsel %vm1640, %v2254, %v2318
        %v2356 = vsel %vm1640, %v2256, %v2320
        %v2357 = vsel %vm1640, %v2258, %v2322
        %v2358 = vsel %vm1640, %v2260, %v2324
        %v2359 = vsel %vm1640, %v2262, %v2326
        %v2360 = vsel %vm1640, %v2264, %v2328
        %v2361 = vmul.f32 %v2345, %v1464
        %v2362 = vmul.f32 %v2346, %v1465
        %v2363 = vmul.f32 %v2347, %v1466
        %v2364 = vmul.f32 %v2348, %v1467
        %v2365 = vmul.f32 %v2349, %v1468
        %v2366 = vmul.f32 %v2350, %v1469
        %v2367 = vmul.f32 %v2351, %v1470
        %v2368 = vmul.f32 %v2352, %v1471
        %v2369 = vmul.f32 %v2353, %v1472
        %v2370 = vmul.f32 %v2354, %v1473
        %v2371 = vmul.f32 %v2355, %v1474
        %v2372 = vmul.f32 %v2356, %v1475
        %v2373 = vmul.f32 %v2357, %v1476
        %v2374 = vmul.f32 %v2358, %v1477
        %v2375 = vmul.f32 %v2359, %v1478
        %v2376 = vmul.f32 %v2360, %v1479
        %v2377 = vadd.f32 %v2185, %v2361
        %v2378 = vadd.f32 %v2186, %v2362
        %v2379 = vadd.f32 %v2187, %v2363
        %v2380 = vadd.f32 %v2188, %v2364
        %v2381 = vadd.f32 %v2189, %v2365
        %v2382 = vadd.f32 %v2190, %v2366
        %v2383 = vadd.f32 %v2191, %v2367
        %v2384 = vadd.f32 %v2192, %v2368
        %v2385 = vadd.f32 %v2193, %v2369
        %v2386 = vadd.f32 %v2194, %v2370
        %v2387 = vadd.f32 %v2195, %v2371
        %v2388 = vadd.f32 %v2196, %v2372
        %v2389 = vadd.f32 %v2197, %v2373
        %v2390 = vadd.f32 %v2198, %v2374
        %v2391 = vadd.f32 %v2199, %v2375
        %v2392 = vadd.f32 %v2200, %v2376
        %v2393 = vmul.f32 %v2377, 0.088388346
        %v2394 = vmul.f32 %v2378, 0.088388346
        %v2395 = vmul.f32 %v2379, 0.088388346
        %v2396 = vmul.f32 %v2380, 0.088388346
        %v2397 = vmul.f32 %v2381, 0.088388346
        %v2398 = vmul.f32 %v2382, 0.088388346
        %v2399 = vmul.f32 %v2383, 0.088388346
        %v2400 = vmul.f32 %v2384, 0.088388346
        %v2401 = vmul.f32 %v2385, 0.088388346
        %v2402 = vmul.f32 %v2386, 0.088388346
        %v2403 = vmul.f32 %v2387, 0.088388346
        %v2404 = vmul.f32 %v2388, 0.088388346
        %v2405 = vmul.f32 %v2389, 0.088388346
        %v2406 = vmul.f32 %v2390, 0.088388346
        %v2407 = vmul.f32 %v2391, 0.088388346
        %v2408 = vmul.f32 %v2392, 0.088388346
        %v2409 = vmul.f32 %v1370, %v1448
        %v2410 = vmul.f32 %v1374, %v1449
        %v2411 = vmul.f32 %v1380, %v1450
        %v2412 = vmul.f32 %v1384, %v1451
        %v2413 = vmul.f32 %v1390, %v1452
        %v2414 = vmul.f32 %v1394, %v1453
        %v2415 = vmul.f32 %v1400, %v1454
        %v2416 = vmul.f32 %v1404, %v1455
        %v2417 = vmul.f32 %v1410, %v1456
        %v2418 = vmul.f32 %v1414, %v1457
        %v2419 = vmul.f32 %v1420, %v1458
        %v2420 = vmul.f32 %v1424, %v1459
        %v2421 = vmul.f32 %v1430, %v1460
        %v2422 = vmul.f32 %v1434, %v1461
        %v2423 = vmul.f32 %v1440, %v1462
        %v2424 = vmul.f32 %v1444, %v1463
        %v2425 = vsub.f32 0.0, %v1370
        %v2426 = vsub.f32 0.0, %v1374
        %v2427 = vsub.f32 0.0, %v1380
        %v2428 = vsub.f32 0.0, %v1384
        %v2429 = vsub.f32 0.0, %v1390
        %v2430 = vsub.f32 0.0, %v1394
        %v2431 = vsub.f32 0.0, %v1400
        %v2432 = vsub.f32 0.0, %v1404
        %v2433 = vsub.f32 0.0, %v1410
        %v2434 = vsub.f32 0.0, %v1414
        %v2435 = vsub.f32 0.0, %v1420
        %v2436 = vsub.f32 0.0, %v1424
        %v2437 = vsub.f32 0.0, %v1430
        %v2438 = vsub.f32 0.0, %v1434
        %v2439 = vsub.f32 0.0, %v1440
        %v2440 = vsub.f32 0.0, %v1444
        %2457 = vrot.lane.b32.xlu0 %v2425, 64
        %v2458 = vpop.permute.xlu0 %2457
        %2459 = vrot.lane.b32.xlu0 %v2426, 64
        %v2460 = vpop.permute.xlu0 %2459
        %2461 = vrot.lane.b32.xlu0 %v2427, 64
        %v2462 = vpop.permute.xlu0 %2461
        %2463 = vrot.lane.b32.xlu0 %v2428, 64
        %v2464 = vpop.permute.xlu0 %2463
        %2465 = vrot.lane.b32.xlu0 %v2429, 64
        %v2466 = vpop.permute.xlu0 %2465
        %2467 = vrot.lane.b32.xlu0 %v2430, 64
        %v2468 = vpop.permute.xlu0 %2467
        %2469 = vrot.lane.b32.xlu0 %v2431, 64
        %v2470 = vpop.permute.xlu0 %2469
        %2471 = vrot.lane.b32.xlu0 %v2432, 64
        %v2472 = vpop.permute.xlu0 %2471
        %2473 = vrot.lane.b32.xlu0 %v2433, 64
        %v2474 = vpop.permute.xlu0 %2473
        %2475 = vrot.lane.b32.xlu0 %v2434, 64
        %v2476 = vpop.permute.xlu0 %2475
        %2477 = vrot.lane.b32.xlu0 %v2435, 64
        %v2478 = vpop.permute.xlu0 %2477
        %2479 = vrot.lane.b32.xlu0 %v2436, 64
        %v2480 = vpop.permute.xlu0 %2479
        %2481 = vrot.lane.b32.xlu0 %v2437, 64
        %v2482 = vpop.permute.xlu0 %2481
        %2483 = vrot.lane.b32.xlu0 %v2438, 64
        %v2484 = vpop.permute.xlu0 %2483
        %2485 = vrot.lane.b32.xlu0 %v2439, 64
        %v2486 = vpop.permute.xlu0 %2485
        %2487 = vrot.lane.b32.xlu0 %v2440, 64
        %v2488 = vpop.permute.xlu0 %2487
        %2521 = vrot.lane.b32.xlu0 %v1370, 64
        %v2522 = vpop.permute.xlu0 %2521
        %2523 = vrot.lane.b32.xlu0 %v1374, 64
        %v2524 = vpop.permute.xlu0 %2523
        %2525 = vrot.lane.b32.xlu0 %v1380, 64
        %v2526 = vpop.permute.xlu0 %2525
        %2527 = vrot.lane.b32.xlu0 %v1384, 64
        %v2528 = vpop.permute.xlu0 %2527
        %2529 = vrot.lane.b32.xlu0 %v1390, 64
        %v2530 = vpop.permute.xlu0 %2529
        %2531 = vrot.lane.b32.xlu0 %v1394, 64
        %v2532 = vpop.permute.xlu0 %2531
        %2533 = vrot.lane.b32.xlu0 %v1400, 64
        %v2534 = vpop.permute.xlu0 %2533
        %2535 = vrot.lane.b32.xlu0 %v1404, 64
        %v2536 = vpop.permute.xlu0 %2535
        %2537 = vrot.lane.b32.xlu0 %v1410, 64
        %v2538 = vpop.permute.xlu0 %2537
        %2539 = vrot.lane.b32.xlu0 %v1414, 64
        %v2540 = vpop.permute.xlu0 %2539
        %2541 = vrot.lane.b32.xlu0 %v1420, 64
        %v2542 = vpop.permute.xlu0 %2541
        %2543 = vrot.lane.b32.xlu0 %v1424, 64
        %v2544 = vpop.permute.xlu0 %2543
        %2545 = vrot.lane.b32.xlu0 %v1430, 64
        %v2546 = vpop.permute.xlu0 %2545
        %2547 = vrot.lane.b32.xlu0 %v1434, 64
        %v2548 = vpop.permute.xlu0 %2547
        %2549 = vrot.lane.b32.xlu0 %v1440, 64
        %v2550 = vpop.permute.xlu0 %2549
        %2551 = vrot.lane.b32.xlu0 %v1444, 64
        %v2552 = vpop.permute.xlu0 %2551
        %v2569 = vsel %vm1640, %v2458, %v2522
        %v2570 = vsel %vm1640, %v2460, %v2524
        %v2571 = vsel %vm1640, %v2462, %v2526
        %v2572 = vsel %vm1640, %v2464, %v2528
        %v2573 = vsel %vm1640, %v2466, %v2530
        %v2574 = vsel %vm1640, %v2468, %v2532
        %v2575 = vsel %vm1640, %v2470, %v2534
        %v2576 = vsel %vm1640, %v2472, %v2536
        %v2577 = vsel %vm1640, %v2474, %v2538
        %v2578 = vsel %vm1640, %v2476, %v2540
        %v2579 = vsel %vm1640, %v2478, %v2542
        %v2580 = vsel %vm1640, %v2480, %v2544
        %v2581 = vsel %vm1640, %v2482, %v2546
        %v2582 = vsel %vm1640, %v2484, %v2548
        %v2583 = vsel %vm1640, %v2486, %v2550
        %v2584 = vsel %vm1640, %v2488, %v2552
        %v2585 = vmul.f32 %v2569, %v1464
        %v2586 = vmul.f32 %v2570, %v1465
        %v2587 = vmul.f32 %v2571, %v1466
        %v2588 = vmul.f32 %v2572, %v1467
        %v2589 = vmul.f32 %v2573, %v1468
        %v2590 = vmul.f32 %v2574, %v1469
        %v2591 = vmul.f32 %v2575, %v1470
        %v2592 = vmul.f32 %v2576, %v1471
        %v2593 = vmul.f32 %v2577, %v1472
        %v2594 = vmul.f32 %v2578, %v1473
        %v2595 = vmul.f32 %v2579, %v1474
        %v2596 = vmul.f32 %v2580, %v1475
        %v2597 = vmul.f32 %v2581, %v1476
        %v2598 = vmul.f32 %v2582, %v1477
        %v2599 = vmul.f32 %v2583, %v1478
        %v2600 = vmul.f32 %v2584, %v1479
        %v2601 = vadd.f32 %v2409, %v2585
        %v2602 = vadd.f32 %v2410, %v2586
        %v2603 = vadd.f32 %v2411, %v2587
        %v2604 = vadd.f32 %v2412, %v2588
        %v2605 = vadd.f32 %v2413, %v2589
        %v2606 = vadd.f32 %v2414, %v2590
        %v2607 = vadd.f32 %v2415, %v2591
        %v2608 = vadd.f32 %v2416, %v2592
        %v2609 = vadd.f32 %v2417, %v2593
        %v2610 = vadd.f32 %v2418, %v2594
        %v2611 = vadd.f32 %v2419, %v2595
        %v2612 = vadd.f32 %v2420, %v2596
        %v2613 = vadd.f32 %v2421, %v2597
        %v2614 = vadd.f32 %v2422, %v2598
        %v2615 = vadd.f32 %v2423, %v2599
        %v2616 = vadd.f32 %v2424, %v2600
        %v2617 = vpack.c.bf16 %v2394, %v2393
        %v2618 = vpack.c.bf16 %v2396, %v2395
        %v2619 = vpack.c.bf16 %v2398, %v2397
        %v2620 = vpack.c.bf16 %v2400, %v2399
        %v2621 = vpack.c.bf16 %v2402, %v2401
        %v2622 = vpack.c.bf16 %v2404, %v2403
        %v2623 = vpack.c.bf16 %v2406, %v2405
        %v2624 = vpack.c.bf16 %v2408, %v2407
        %v2633 = vunpack.c.l.b16 %v2617
        %v2634 = vunpack.c.h.b16 %v2617
        %v2635 = vunpack.c.l.b16 %v2618
        %v2636 = vunpack.c.h.b16 %v2618
        %v2637 = vunpack.c.l.b16 %v2619
        %v2638 = vunpack.c.h.b16 %v2619
        %v2639 = vunpack.c.l.b16 %v2620
        %v2640 = vunpack.c.h.b16 %v2620
        %v2641 = vunpack.c.l.b16 %v2621
        %v2642 = vunpack.c.h.b16 %v2621
        %v2643 = vunpack.c.l.b16 %v2622
        %v2644 = vunpack.c.h.b16 %v2622
        %v2645 = vunpack.c.l.b16 %v2623
        %v2646 = vunpack.c.h.b16 %v2623
        %v2647 = vunpack.c.l.b16 %v2624
        %v2648 = vunpack.c.h.b16 %v2624
        %v2649 = vpack.c.b16 %v2633, %v2633
        %v2650 = vpack.c.b16 %v2634, %v2634
        %v2651 = vpack.c.b16 %v2635, %v2635
        %v2652 = vpack.c.b16 %v2636, %v2636
        %v2653 = vpack.c.b16 %v2637, %v2637
        %v2654 = vpack.c.b16 %v2638, %v2638
        %v2655 = vpack.c.b16 %v2639, %v2639
        %v2656 = vpack.c.b16 %v2640, %v2640
        %v2657 = vpack.c.b16 %v2641, %v2641
        %v2658 = vpack.c.b16 %v2642, %v2642
        %v2659 = vpack.c.b16 %v2643, %v2643
        %v2660 = vpack.c.b16 %v2644, %v2644
        %v2661 = vpack.c.b16 %v2645, %v2645
        %v2662 = vpack.c.b16 %v2646, %v2646
        %v2663 = vpack.c.b16 %v2647, %v2647
        %v2664 = vpack.c.b16 %v2648, %v2648
        %s2681 = scalar_lea.vmem %s414, 64 [#allocation9]
        %2682 = vst [vmem:[%s2681] sm:$0xf] %v2649
        %2683 = vst [vmem:[%s2681 + $0x4] sm:$0xf] %v2650
        %2684 = vst [vmem:[%s2681 + $0x8] sm:$0xf] %v2651
        %2685 = vst [vmem:[%s2681 + $0xc] sm:$0xf] %v2652
        %2686 = vst [vmem:[%s2681 + $0x10] sm:$0xf] %v2653
        %2687 = vst [vmem:[%s2681 + $0x14] sm:$0xf] %v2654
        %2688 = vst [vmem:[%s2681 + $0x18] sm:$0xf] %v2655
        %2689 = vst [vmem:[%s2681 + $0x1c] sm:$0xf] %v2656
        %2690 = vst [vmem:[%s2681 + $0x20] sm:$0xf] %v2657
        %2691 = vst [vmem:[%s2681 + $0x24] sm:$0xf] %v2658
        %2692 = vst [vmem:[%s2681 + $0x28] sm:$0xf] %v2659
        %2693 = vst [vmem:[%s2681 + $0x2c] sm:$0xf] %v2660
        %2694 = vst [vmem:[%s2681 + $0x30] sm:$0xf] %v2661
        %2695 = vst [vmem:[%s2681 + $0x34] sm:$0xf] %v2662
        %2696 = vst [vmem:[%s2681 + $0x38] sm:$0xf] %v2663
        %2697 = vst [vmem:[%s2681 + $0x3c] sm:$0xf] %v2664
        %2698 = vxpose.xlu0.b32.start [1/16] %v2601, 128
        %2699 = vxpose.xlu0.b32.cont [2/16] %v2602, 128
        %2700 = vxpose.xlu0.b32.cont [3/16] %v2603, 128
        %2701 = vxpose.xlu0.b32.cont [4/16] %v2604, 128
        %2702 = vxpose.xlu0.b32.cont [5/16] %v2605, 128
        %2703 = vxpose.xlu0.b32.cont [6/16] %v2606, 128
        %2704 = vxpose.xlu0.b32.cont [7/16] %v2607, 128
        %2705 = vxpose.xlu0.b32.cont [8/16] %v2608, 128
        %2706 = vxpose.xlu0.b32.cont [9/16] %v2609, 128
        %2707 = vxpose.xlu0.b32.cont [10/16] %v2610, 128
        %2708 = vxpose.xlu0.b32.cont [11/16] %v2611, 128
        %2709 = vxpose.xlu0.b32.cont [12/16] %v2612, 128
        %2710 = vxpose.xlu0.b32.cont [13/16] %v2613, 128
        %2711 = vxpose.xlu0.b32.cont [14/16] %v2614, 128
        %2712 = vxpose.xlu0.b32.cont [15/16] %v2615, 128
        %2713 = vxpose.xlu0.b32.end [16/16] %v2616, 128
        %v2714 = vpop.trf.xlu0
        %v2715 = vpop.trf.xlu0
        %v2716 = vpop.trf.xlu0
        %v2717 = vpop.trf.xlu0
        %v2718 = vpop.trf.xlu0
        %v2719 = vpop.trf.xlu0
        %v2720 = vpop.trf.xlu0
        %v2721 = vpop.trf.xlu0
        %v2722 = vpop.trf.xlu0
        %v2723 = vpop.trf.xlu0
        %v2724 = vpop.trf.xlu0
        %v2725 = vpop.trf.xlu0
        %v2726 = vpop.trf.xlu0
        %v2727 = vpop.trf.xlu0
        %v2728 = vpop.trf.xlu0
        %v2729 = vpop.trf.xlu0
        %v2730 = vpack.c.bf16 %v2715, %v2714
        %v2731 = vpack.c.bf16 %v2717, %v2716
        %v2732 = vpack.c.bf16 %v2719, %v2718
        %v2733 = vpack.c.bf16 %v2721, %v2720
        %v2734 = vpack.c.bf16 %v2723, %v2722
        %v2735 = vpack.c.bf16 %v2725, %v2724
        %v2736 = vpack.c.bf16 %v2727, %v2726
        %v2737 = vpack.c.bf16 %v2729, %v2728
        %v2746 = vunpack.c.l.b16 %v2730
        %v2747 = vunpack.c.h.b16 %v2730
        %v2748 = vunpack.c.l.b16 %v2731
        %v2749 = vunpack.c.h.b16 %v2731
        %v2750 = vunpack.c.l.b16 %v2732
        %v2751 = vunpack.c.h.b16 %v2732
        %v2752 = vunpack.c.l.b16 %v2733
        %v2753 = vunpack.c.h.b16 %v2733
        %v2754 = vunpack.c.l.b16 %v2734
        %v2755 = vunpack.c.h.b16 %v2734
        %v2756 = vunpack.c.l.b16 %v2735
        %v2757 = vunpack.c.h.b16 %v2735
        %v2758 = vunpack.c.l.b16 %v2736
        %v2759 = vunpack.c.h.b16 %v2736
        %v2760 = vunpack.c.l.b16 %v2737
        %v2761 = vunpack.c.h.b16 %v2737
        %v2762 = vpack.c.b16 %v2746, %v2746
        %v2763 = vpack.c.b16 %v2747, %v2747
        %v2764 = vpack.c.b16 %v2748, %v2748
        %v2765 = vpack.c.b16 %v2749, %v2749
        %v2766 = vpack.c.b16 %v2750, %v2750
        %v2767 = vpack.c.b16 %v2751, %v2751
        %v2768 = vpack.c.b16 %v2752, %v2752
        %v2769 = vpack.c.b16 %v2753, %v2753
        %v2770 = vpack.c.b16 %v2754, %v2754
        %v2771 = vpack.c.b16 %v2755, %v2755
        %v2772 = vpack.c.b16 %v2756, %v2756
        %v2773 = vpack.c.b16 %v2757, %v2757
        %v2774 = vpack.c.b16 %v2758, %v2758
        %v2775 = vpack.c.b16 %v2759, %v2759
        %v2776 = vpack.c.b16 %v2760, %v2760
        %v2777 = vpack.c.b16 %v2761, %v2761
        %s2794 = scalar_lea.vmem %s421, 64 [#allocation10]
        %2795 = vst [vmem:[%s2794] sm:$0xf] %v2762
        %2796 = vst [vmem:[%s2794 + $0x4] sm:$0xf] %v2763
        %2797 = vst [vmem:[%s2794 + $0x8] sm:$0xf] %v2764
        %2798 = vst [vmem:[%s2794 + $0xc] sm:$0xf] %v2765
        %2799 = vst [vmem:[%s2794 + $0x10] sm:$0xf] %v2766
        %2800 = vst [vmem:[%s2794 + $0x14] sm:$0xf] %v2767
        %2801 = vst [vmem:[%s2794 + $0x18] sm:$0xf] %v2768
        %2802 = vst [vmem:[%s2794 + $0x1c] sm:$0xf] %v2769
        %2803 = vst [vmem:[%s2794 + $0x20] sm:$0xf] %v2770
        %2804 = vst [vmem:[%s2794 + $0x24] sm:$0xf] %v2771
        %2805 = vst [vmem:[%s2794 + $0x28] sm:$0xf] %v2772
        %2806 = vst [vmem:[%s2794 + $0x2c] sm:$0xf] %v2773
        %2807 = vst [vmem:[%s2794 + $0x30] sm:$0xf] %v2774
        %2808 = vst [vmem:[%s2794 + $0x34] sm:$0xf] %v2775
        %2809 = vst [vmem:[%s2794 + $0x38] sm:$0xf] %v2776
        %2810 = vst [vmem:[%s2794 + $0x3c] sm:$0xf] %v2777
        %v2811 = vpack.c.bf16 %v1376, %v1372
        %v2812 = vpack.c.bf16 %v1386, %v1382
        %v2813 = vpack.c.bf16 %v1396, %v1392
        %v2814 = vpack.c.bf16 %v1406, %v1402
        %v2815 = vpack.c.bf16 %v1416, %v1412
        %v2816 = vpack.c.bf16 %v1426, %v1422
        %v2817 = vpack.c.bf16 %v1436, %v1432
        %v2818 = vpack.c.bf16 %v1446, %v1442
        %v2827 = vunpack.c.l.b16 %v2811
        %v2828 = vunpack.c.h.b16 %v2811
        %v2829 = vunpack.c.l.b16 %v2812
        %v2830 = vunpack.c.h.b16 %v2812
        %v2831 = vunpack.c.l.b16 %v2813
        %v2832 = vunpack.c.h.b16 %v2813
        %v2833 = vunpack.c.l.b16 %v2814
        %v2834 = vunpack.c.h.b16 %v2814
        %v2835 = vunpack.c.l.b16 %v2815
        %v2836 = vunpack.c.h.b16 %v2815
        %v2837 = vunpack.c.l.b16 %v2816
        %v2838 = vunpack.c.h.b16 %v2816
        %v2839 = vunpack.c.l.b16 %v2817
        %v2840 = vunpack.c.h.b16 %v2817
        %v2841 = vunpack.c.l.b16 %v2818
        %v2842 = vunpack.c.h.b16 %v2818
        %v2843 = vpack.c.b16 %v2827, %v2827
        %v2844 = vpack.c.b16 %v2828, %v2828
        %v2845 = vpack.c.b16 %v2829, %v2829
        %v2846 = vpack.c.b16 %v2830, %v2830
        %v2847 = vpack.c.b16 %v2831, %v2831
        %v2848 = vpack.c.b16 %v2832, %v2832
        %v2849 = vpack.c.b16 %v2833, %v2833
        %v2850 = vpack.c.b16 %v2834, %v2834
        %v2851 = vpack.c.b16 %v2835, %v2835
        %v2852 = vpack.c.b16 %v2836, %v2836
        %v2853 = vpack.c.b16 %v2837, %v2837
        %v2854 = vpack.c.b16 %v2838, %v2838
        %v2855 = vpack.c.b16 %v2839, %v2839
        %v2856 = vpack.c.b16 %v2840, %v2840
        %v2857 = vpack.c.b16 %v2841, %v2841
        %v2858 = vpack.c.b16 %v2842, %v2842
        %s2875 = scalar_lea.vmem %s428, 64 [#allocation12]
        %2876 = vst [vmem:[%s2875] sm:$0xf] %v2843
        %2877 = vst [vmem:[%s2875 + $0x4] sm:$0xf] %v2844
        %2878 = vst [vmem:[%s2875 + $0x8] sm:$0xf] %v2845
        %2879 = vst [vmem:[%s2875 + $0xc] sm:$0xf] %v2846
        %2880 = vst [vmem:[%s2875 + $0x10] sm:$0xf] %v2847
        %2881 = vst [vmem:[%s2875 + $0x14] sm:$0xf] %v2848
        %2882 = vst [vmem:[%s2875 + $0x18] sm:$0xf] %v2849
        %2883 = vst [vmem:[%s2875 + $0x1c] sm:$0xf] %v2850
        %2884 = vst [vmem:[%s2875 + $0x20] sm:$0xf] %v2851
        %2885 = vst [vmem:[%s2875 + $0x24] sm:$0xf] %v2852
        %2886 = vst [vmem:[%s2875 + $0x28] sm:$0xf] %v2853
        %2887 = vst [vmem:[%s2875 + $0x2c] sm:$0xf] %v2854
        %2888 = vst [vmem:[%s2875 + $0x30] sm:$0xf] %v2855
        %2889 = vst [vmem:[%s2875 + $0x34] sm:$0xf] %v2856
        %2890 = vst [vmem:[%s2875 + $0x38] sm:$0xf] %v2857
        %2891 = vst [vmem:[%s2875 + $0x3c] sm:$0xf] %v2858
        %s2892 = sand.u32 %s169, 1
        %s2893 = scalar_lea.sflag [#allocation4], %s2892
        %s2894 = sand.u32 %s169, 1
        %s2895 = smul.addr %s2894, 128
        %s2896 = scalar_lea.vmem [#allocation9], %s2895
        %s2897 = sand.u32 %s28, 1
        %s2898 = scalar_lea.sflag [#allocation11], %s2897
        %s2899 = sand.u32 %s199, 1
        %s2900 = smul.addr %s2899, 128
        %s2901 = scalar_lea.vmem [#allocation10], %s2900
        %s2902 = sand.u32 %s28, 1
        %s2903 = scalar_lea.sflag [#allocation11], %s2902
        %s2904 = sand.u32 %s229, 1
        %s2905 = smul.addr %s2904, 128
        %s2906 = scalar_lea.vmem [#allocation12], %s2905
        // Predicated region
        $region53: #{tpu_custom_call.1} parent=35 // pred_check
          %p2907 = pneg %p179
        $region54: #{tpu_custom_call.1} parent=35 // pred_check_branch
          %2909 = sbr.rel (%p2907) target = $region56
        $region55: #{tpu_custom_call.1} parent=35 // pred_region
          #allocation14 [shape = 'u32[6]{0}', space=smem, size = 0x18, scoped, tag = 'DMA stride descriptor']
          %s2910 = smul.u32 2, %s34
          %s2911 = smul.u32 16, %s35
          %s2913 = ssub.s32 2048, 2048
          %2914 = vsyncadd %s2893, %s2913
          %s2915 = smul.addr %s2910, 32
          %s2916 = sadd.s32 %s2911, %s2915
          %s2917 = smul.addr %s33, 64
          %s2918 = sadd.s32 %s2916, %s2917
          %s2919 = smul.addr %s2918, 64
          %s2920 = scalar_lea.hbm %s4, %s2919
          %s2922 = sshll.u32 1, 14
          %s2923 = sxor.u32 4294967295, %s2922
          %s2926 = sshll.u32 7, 18
          %s2927 = sxor.u32 4294967295, %s2926
          %s2928 = sand.u32 0, %s2927
          %s2930 = sor.u32 %s2928, 0
          %s2932 = sshll.u32 3, 24
          %s2933 = sxor.u32 4294967295, %s2932
          %s2934 = sand.u32 %s2930, %s2933
          %s2936 = sor.u32 %s2934, 0
          %s2937 = sshll.u32 %s2896, 4
          %s2938 = int_to_ptr.vmem [resolvable:$true] %s2937
          %2944 = sst [smem:[#allocation14]] 1024
          %s2945 = scalar_lea.smem [#allocation14], 1
          %2946 = sst [smem:[%s2945]] 2048
          %s2947 = scalar_lea.smem [#allocation14], 2
          %2948 = sst [smem:[%s2947]] 16
          %s2949 = scalar_lea.smem [#allocation14], 3
          %2950 = sst [smem:[%s2949]] 64
          %s2951 = scalar_lea.smem [#allocation14], 4
          %2952 = sst [smem:[%s2951]] 64
          %s2953 = scalar_lea.smem [#allocation14], 5
          %2954 = sst [smem:[%s2953]] 4
          %2956 = dma.general %s2938, 2048, %s2920, %s2893, [#allocation13], [#allocation14], %s2936, 0
        $region56: #{tpu_custom_call.1} parent=35 // pred_fallthru
          _
        // Predicated region
        $region57: #{tpu_custom_call.1} parent=35 // pred_check
          %p2957 = pneg %p209
        $region58: #{tpu_custom_call.1} parent=35 // pred_check_branch
          %2959 = sbr.rel (%p2957) target = $region60
        $region59: #{tpu_custom_call.1} parent=35 // pred_region
          %s2960 = smul.u32 2, %s34
          %s2962 = ssub.s32 2048, 2048
          %2963 = vsyncadd %s2898, %s2962
          %s2964 = smul.addr %s2960, 32
          %s2965 = sadd.s32 %s35, %s2964
          %s2966 = smul.addr %s33, 64
          %s2967 = sadd.s32 %s2965, %s2966
          %s2968 = smul.addr %s2967, 64
          %s2969 = scalar_lea.hbm %s5, %s2968
          %s2970 = sshll.u32 %s2901, 4
          %s2971 = int_to_ptr.vmem [resolvable:$true] %s2970
          %2976 = dma.vmem_to_hbm [thread:$0]  %s2971, 2048, %s2969, %s2898, 64, 128, 4
        $region60: #{tpu_custom_call.1} parent=35 // pred_fallthru
          _
        // Predicated region
        $region61: #{tpu_custom_call.1} parent=35 // pred_check
          %p2977 = pneg %p239
        $region62: #{tpu_custom_call.1} parent=35 // pred_check_branch
          %2979 = sbr.rel (%p2977) target = $region64
        $region63: #{tpu_custom_call.1} parent=35 // pred_region
          #allocation16 [shape = 'u32[6]{0}', space=smem, size = 0x18, scoped, tag = 'DMA stride descriptor']
          %s2980 = smul.u32 2, %s34
          %s2981 = smul.u32 16, %s35
          %s2983 = ssub.s32 2048, 2048
          %2984 = vsyncadd %s2903, %s2983
          %s2985 = smul.addr %s2980, 32
          %s2986 = sadd.s32 %s2981, %s2985
          %s2987 = smul.addr %s33, 64
          %s2988 = sadd.s32 %s2986, %s2987
          %s2989 = smul.addr %s2988, 64
          %s2990 = scalar_lea.hbm %s6, %s2989
          %s2992 = sshll.u32 1, 14
          %s2993 = sxor.u32 4294967295, %s2992
          %s2996 = sshll.u32 7, 18
          %s2997 = sxor.u32 4294967295, %s2996
          %s2998 = sand.u32 0, %s2997
          %s3000 = sor.u32 %s2998, 0
          %s3002 = sshll.u32 3, 24
          %s3003 = sxor.u32 4294967295, %s3002
          %s3004 = sand.u32 %s3000, %s3003
          %s3006 = sor.u32 %s3004, 0
          %s3007 = sshll.u32 %s2906, 4
          %s3008 = int_to_ptr.vmem [resolvable:$true] %s3007
          %3014 = sst [smem:[#allocation16]] 1024
          %s3015 = scalar_lea.smem [#allocation16], 1
          %3016 = sst [smem:[%s3015]] 2048
          %s3017 = scalar_lea.smem [#allocation16], 2
          %3018 = sst [smem:[%s3017]] 16
          %s3019 = scalar_lea.smem [#allocation16], 3
          %3020 = sst [smem:[%s3019]] 64
          %s3021 = scalar_lea.smem [#allocation16], 4
          %3022 = sst [smem:[%s3021]] 64
          %s3023 = scalar_lea.smem [#allocation16], 5
          %3024 = sst [smem:[%s3023]] 4
          %3026 = dma.general %s3008, 2048, %s2990, %s2903, [#allocation15], [#allocation16], %s3006, 0
        $region64: #{tpu_custom_call.1} parent=35 // pred_fallthru
          _
      $region36: #{tpu_custom_call.1} parent=5 // pred_fallthru
        _
      %p3027 = scmp.le.s32.totalorder 2, %s23
      // Predicated region
      $region65: #{tpu_custom_call.1} parent=5 // pred_check
        %p3028 = pneg %p3027
      $region66: #{tpu_custom_call.1} parent=5 // pred_check_branch
        %3030 = sbr.rel (%p3028) target = $region68
      $region67: #{tpu_custom_call.1} parent=5 // pred_region
        %s3031 = ssub.s32 %s23, 2
        // Predicated region
        $region69: #{tpu_custom_call.1} parent=67 // pred_check
          %p3032 = pneg %p185
        $region70: #{tpu_custom_call.1} parent=67 // pred_check_branch
          %3034 = sbr.rel (%p3032) target = $region72
        $region71: #{tpu_custom_call.1} parent=67 // pred_region
          %s3035 = sand.u32 %s170, 1
          %s3036 = scalar_lea.sflag [#allocation4], %s3035
          %s3037 = sand.u32 %s170, 1
          %s3038 = smul.addr %s3037, 128
          %s3039 = scalar_lea.vmem [#allocation9], %s3038
          %3040 = dma.done %s3036, 2048
        $region72: #{tpu_custom_call.1} parent=67 // pred_fallthru
          _
        // Predicated region
        $region73: #{tpu_custom_call.1} parent=67 // pred_check
          %p3041 = pneg %p215
        $region74: #{tpu_custom_call.1} parent=67 // pred_check_branch
          %3043 = sbr.rel (%p3041) target = $region76
        $region75: #{tpu_custom_call.1} parent=67 // pred_region
          %s3044 = sand.u32 %s29, 1
          %s3045 = scalar_lea.sflag [#allocation11], %s3044
          %s3046 = sand.u32 %s200, 1
          %s3047 = smul.addr %s3046, 128
          %s3048 = scalar_lea.vmem [#allocation10], %s3047
          %3049 = dma.done %s3045, 2048
        $region76: #{tpu_custom_call.1} parent=67 // pred_fallthru
          _
        // Predicated region
        $region77: #{tpu_custom_call.1} parent=67 // pred_check
          %p3050 = pneg %p245
        $region78: #{tpu_custom_call.1} parent=67 // pred_check_branch
          %3052 = sbr.rel (%p3050) target = $region80
        $region79: #{tpu_custom_call.1} parent=67 // pred_region
          %s3053 = sand.u32 %s29, 1
          %s3054 = scalar_lea.sflag [#allocation11], %s3053
          %s3055 = sand.u32 %s230, 1
          %s3056 = smul.addr %s3055, 128
          %s3057 = scalar_lea.vmem [#allocation12], %s3056
          %3058 = dma.done %s3054, 2048
        $region80: #{tpu_custom_call.1} parent=67 // pred_fallthru
          _
      $region68: #{tpu_custom_call.1} parent=5 // pred_fallthru
        _
    $region6: #{tpu_custom_call.1} parent=1 // loop_footer
      %s27 = sadd.s32 1, %s23
    $region7: #{tpu_custom_call.1} parent=1 // loop_footer_branch
      %22 = sbr.rel target = $region3
    $region8: #{tpu_custom_call.1} parent=1 // loop_exit
      _
    %3059 = vsyncpa [#allocation3], 1
    %s3060 = scalar_lea.sflag [#allocation3], 1
    %3061 = vsyncpa %s3060, 1
    %3062 = vsyncpa [#allocation6], 1
    %3063 = vsyncpa [#allocation4], 1
    %s3064 = scalar_lea.sflag [#allocation4], 1
    %3065 = vsyncpa %s3064, 1
    %3066 = vsyncpa [#allocation11], 1
    %s3067 = scalar_lea.sflag [#allocation11], 1
    %3068 = vsyncpa %s3067, 1

</llo_original>
